<compile_context>
chip_gen: v5e
topology: v5e:2x2
jax: 0.10.0
libtpu: 0.0.40
codegen_flags: <defaults>
</compile_context>

<pallas_src>
from functools import partial

import jax
import jax.numpy as jnp
from jax.experimental import pallas as pl
from jax.experimental.pallas import tpu as pltpu


def _make_fused_kernel(S, T, H):
    """Fused encoder+decoder kernel for static sizes S (history), T (horizon), H (hidden)."""
    H3, H4 = 3 * H, 4 * H
    f32, bf16 = jnp.float32, jnp.bfloat16

    def kernel(x_ref, aux_ref, wrec_ref, waux_ref, vsm_ref, out_ref):
        x = x_ref[...]                                   # (B, S, 1) pm25 history
        B = x.shape[0]

        # ---- weight slabs (tiny; loaded once) ----
        enc_w = wrec_ref[0][:, :H3]                      # (H, 3H) bf16  [Whh_r|Whh_z|Whh_n]
        dec_w = wrec_ref[1]                              # (H, 4H) bf16  [A_r|A_z|A_n|Whh_n]
        enc_wih = vsm_ref[0:1, :H3]                      # (1, 3H)
        enc_bih = vsm_ref[1:2, :H3]                      # (1, 3H)
        enc_bhh = vsm_ref[2:3, :H3]                      # (1, 3H)
        wpm4    = vsm_ref[3:4, :]                        # (1, 4H) [Wpm_r|Wpm_z|Wpm_n|0]
        wout_r  = vsm_ref[4:5, :H]                       # (1, H)  Linear weight (row layout)
        bias4   = vsm_ref[5:6, :]                        # (1, 4H) folded decoder biases
        bout    = vsm_ref[6:7, 0:1]                      # (1, 1)  Linear bias

        # ---- encoder input-side gates hoisted out of the recurrence: (B, S, 3H) ----
        gi_enc = x * enc_wih[None] + enc_bih[None]

        # ---- encoder nn.GRU(1, H), h0 = 0, unrolled over S ----
        h = jnp.zeros((B, H), f32)
        for t in range(S):
            if t == 0:
                hh = enc_bhh                             # h0 == 0: skip the matmul
            else:
                hh = jnp.dot(h.astype(bf16), enc_w,
                             preferred_element_type=f32) + enc_bhh
            gi = gi_enc[:, t, :]
            r = jax.nn.sigmoid(gi[:, :H] + hh[:, :H])
            z = jax.nn.sigmoid(gi[:, H:2 * H] + hh[:, H:2 * H])
            n = jnp.tanh(gi[:, 2 * H:] + r * hh[:, 2 * H:])
            h = (1.0 - z) * n + z * h

        # ---- decoder aux-side constants: one (B*T, aux)@(aux, 4H) matmul (off the chain) ----
        c_all = (jnp.dot(aux_ref[...], waux_ref[...],
                         preferred_element_type=f32) + bias4).reshape(B, T, H4)

        # ---- t=0 correction: fold assumes cur = h@wout + bout, actual cur0 = last pm25 ----
        cur0 = x[:, S - 1, :]                                         # (B, 1)
        fake0 = jnp.sum(h * wout_r, axis=-1, keepdims=True) + bout    # (B, 1)
        corr0 = (cur0 - fake0) * wpm4                                 # (B, 4H); hh_n block is 0

        # ---- decoder GRUCell(13, H) with folded readout, unrolled over T ----
        hs = []
        for t in range(T):
            pre = jnp.dot(h.astype(bf16), dec_w,
                          preferred_element_type=f32) + c_all[:, t, :]
            if t == 0:
                pre = pre + corr0
            r = jax.nn.sigmoid(pre[:, :H])
            z = jax.nn.sigmoid(pre[:, H:2 * H])
            n = jnp.tanh(pre[:, 2 * H:3 * H] + r * pre[:, 3 * H:])
            h = (1.0 - z) * n + z * h
            hs.append(h)

        # ---- Linear(H, 1) readout for all steps at once + single output store ----
        h_all = jnp.stack(hs, axis=1)                                  # (B, T, H)
        out = jnp.sum(h_all * wout_r[None], axis=-1, keepdims=True) + bout
        out_ref[...] = out.astype(out_ref.dtype)

    return kernel


def init_params(key, hid, aux_dim=12, out_size=1):
    """PyTorch-style U(-1/sqrt(H), 1/sqrt(H)) init; gates stacked on a leading (r, z, n) axis."""
    bound = 1.0 / float(hid) ** 0.5
    keys = jax.random.split(key, 11)
    u = lambda kk, shape: jax.random.uniform(kk, shape, jnp.float32, -bound, bound)
    return dict(
        enc_wih=u(keys[0], (3, 1, hid)),            # GRU(1,H) input weights per gate
        enc_whh=u(keys[1], (3, hid, hid)),
        enc_bih=u(keys[2], (3, 1, hid)),
        enc_bhh=u(keys[3], (3, 1, hid)),
        dec_wih_pm=u(keys[4], (3, 1, hid)),         # GRUCell(13,H): pm25 column
        dec_wih_aux=u(keys[5], (3, aux_dim, hid)),  #                12 auxiliary columns
        dec_whh=u(keys[6], (3, hid, hid)),
        dec_bih=u(keys[7], (3, 1, hid)),
        dec_bhh=u(keys[8], (3, 1, hid)),
        dec_wout=u(keys[9], (hid, out_size)),       # Linear(H, output_size)
        dec_bout=u(keys[10], (1, out_size)),
    )


def _pack_params(params):
    """Pack the 11 small tensors into 3 slabs with fused gate / folded-readout layout."""
    f32 = jnp.float32
    H = params['enc_whh'].shape[-1]
    aux_dim = params['dec_wih_aux'].shape[1]
    out_size = params['dec_wout'].shape[-1]
    assert out_size == 1, "autoregressive feedback assumes output_size == 1"
    H3, H4 = 3 * H, 4 * H

    wout = params['dec_wout']                       # (H, 1)
    bout = params['dec_bout']                       # (1, 1)
    wpm = params['dec_wih_pm']                      # (3, 1, H)
    whh = params['dec_whh']                         # (3, H, H)

    # recurrent slabs (bf16 for single-pass MXU on the serial chain)
    enc_whh3 = jnp.concatenate([params['enc_whh'][g] for g in range(3)], axis=1)   # (H, 3H)
    dec_fold = jnp.concatenate(
        [whh[0] + wout @ wpm[0],        # A_r = Whh_r + wout ⊗ Wpm_r
         whh[1] + wout @ wpm[1],        # A_z
         wout @ wpm[2],                 # A_n (rank-1, gi_n block)
         whh[2]], axis=1)                                                          # (H, 4H)
    enc_pad = jnp.pad(enc_whh3, ((0, 0), (0, H4 - H3)))
    w_rec = jnp.stack([enc_pad, dec_fold]).astype(jnp.bfloat16)                    # (2, H, 4H)

    # aux-side input weights (off the serial chain; kept f32)
    waux = params['dec_wih_aux']
    w_aux4 = jnp.concatenate([waux[0], waux[1], waux[2],
                              jnp.zeros((aux_dim, H), f32)], axis=1)               # (aux, 4H)

    # small-vector slab: one (8, 4H) f32 tile
    row = lambda v: jnp.pad(v, ((0, 0), (0, H4 - v.shape[1])))
    bih, bhh = params['dec_bih'], params['dec_bhh']
    bias4 = jnp.concatenate([bih[0] + bhh[0] + bout * wpm[0],
                             bih[1] + bhh[1] + bout * wpm[1],
                             bih[2] + bout * wpm[2],
                             bhh[2]], axis=1)                                      # (1, 4H)
    wpm4 = jnp.concatenate([wpm[0], wpm[1], wpm[2], jnp.zeros((1, H), f32)], axis=1)
    v_small = jnp.concatenate([
        row(jnp.concatenate([params['enc_wih'][g] for g in range(3)], axis=1)),    # 0: enc W_ih
        row(jnp.concatenate([params['enc_bih'][g] for g in range(3)], axis=1)),    # 1: enc b_ih
        row(jnp.concatenate([params['enc_bhh'][g] for g in range(3)], axis=1)),    # 2: enc b_hh
        wpm4,                                                                      # 3: Wpm4
        row(wout.T),                                                               # 4: wout row
        bias4,                                                                     # 5: folded biases
        row(bout),                                                                 # 6: bout
        jnp.zeros((1, H4), f32),                                                   # 7: pad
    ], axis=0)
    return w_rec, w_aux4, v_small


@partial(jax.jit, static_argnames=('pred_len',))
def cgf_en_de_forward(params, auxiliary, st_his, pred_len):
    """Eval-mode forward of CGF_En_De.  auxiliary: (B,T,12), st_his: (B,S,1) -> (B,T,1)."""
    B, S, _ = st_his.shape
    T = int(pred_len)
    H = params['enc_whh'].shape[-1]
    aux_dim = auxiliary.shape[-1]
    out_size = params['dec_wout'].shape[-1]

    w_rec, w_aux4, v_small = _pack_params(params)
    # Free, layout-preserving collapse of the leading dims (no transpose, no data movement).
    aux2d = auxiliary.astype(jnp.float32).reshape(B * T, aux_dim)

    kernel = _make_fused_kernel(S, T, H)
    vmem = pl.BlockSpec(memory_space=pltpu.MemorySpace.VMEM)
    return pl.pallas_call(
        kernel,
        out_shape=jax.ShapeDtypeStruct((B, T, out_size), jnp.float32),
        in_specs=[vmem] * 5,
        out_specs=vmem,
    )(st_his.astype(jnp.float32), aux2d, w_rec, w_aux4, v_small)


def _ref_forward(params, auxiliary, st_his, T):
    """Pure-JAX f32 reference (matches PyTorch GRU / GRUCell / Linear semantics)."""
    B = st_his.shape[0]
    H = params['enc_whh'].shape[-1]

    def gru(gi, h, whh, bhh):
        hr = h @ whh[0] + bhh[0]
        hz = h @ whh[1] + bhh[1]
        hn = h @ whh[2] + bhh[2]
        r = jax.nn.sigmoid(gi[0] + hr)
        z = jax.nn.sigmoid(gi[1] + hz)
        n = jnp.tanh(gi[2] + r * hn)
        return (1.0 - z) * n + z * h

    h = jnp.zeros((B, H), jnp.float32)
    for t in range(st_his.shape[1]):
        x_t = st_his[:, t, :]
        gi = [x_t * params['enc_wih'][g] + params['enc_bih'][g] for g in range(3)]
        h = gru(gi, h, params['enc_whh'], params['enc_bhh'])
    cur = st_his[:, -1, :1]
    preds = []
    for t in range(T):
        gi = [cur * params['dec_wih_pm'][g]
              + auxiliary[:, t, :] @ params['dec_wih_aux'][g]
              + params['dec_bih'][g] for g in range(3)]
        h = gru(gi, h, params['dec_whh'], params['dec_bhh'])
        out = h @ params['dec_wout'] + params['dec_bout']
        preds.append(out)
        cur = out
    return jnp.stack(preds, axis=1)


if __name__ == "__main__":
    config = dict(hidRNN=32, output_size=1, PredictionTimePeriods=8, dropout=0.0)
    B, seq_hist, aux_dim = 4, 8, 12          # feature_size = 1 (pm25) + 12 (aux) = 13
    H, T = config['hidRNN'], config['PredictionTimePeriods']

    key = jax.random.PRNGKey(0)
    kp, ka, kx = jax.random.split(key, 3)
    params = init_params(kp, H, aux_dim, config['output_size'])
    auxiliary = jax.random.normal(ka, (B, T, aux_dim), jnp.float32)
    st_his = jax.random.normal(kx, (B, seq_hist, 1), jnp.float32)

    out = cgf_en_de_forward(params, auxiliary, st_his, T)
    out = jax.block_until_ready(out)
    assert out.shape == (B, T, config['output_size'])

    ref = _ref_forward(params, auxiliary, st_his, T)
    # bf16 MXU operands on the 16-step recurrence vs. the all-f32 reference -> relaxed tolerance.
    assert jnp.allclose(out, ref, rtol=1e-2, atol=1e-2), "mismatch vs JAX reference"

    print("KERNEL_OK")
</pallas_src>

<mosaic_0001>
module attributes {stable_mosaic.version = 11 : i64} {
  func.func @kernel(%arg0: memref<4x8x1xf32, #tpu.memory_space<vmem>>, %arg1: memref<32x12xf32, #tpu.memory_space<vmem>>, %arg2: memref<2x32x128xbf16, #tpu.memory_space<vmem>>, %arg3: memref<12x128xf32, #tpu.memory_space<vmem>>, %arg4: memref<8x128xf32, #tpu.memory_space<vmem>>, %arg5: memref<4x8x1xf32, #tpu.memory_space<vmem>>) attributes {dimension_semantics = [], scalar_prefetch = 0 : i64, scratch_operands = 0 : i64, tpu.core_type = #tpu.core_type<tc>} {
    %c0 = arith.constant 0 : index
    %c0_0 = arith.constant 0 : index
    %c0_1 = arith.constant 0 : index
    %0 = vector.load %arg0[%c0, %c0_0, %c0_1] : memref<4x8x1xf32, #tpu.memory_space<vmem>>, vector<4x8x1xf32>
    %c0_2 = arith.constant 0 : index
    %c0_3 = arith.constant 0 : index
    %c0_4 = arith.constant 0 : index
    %1 = vector.load %arg2[%c0_2, %c0_3, %c0_4] : memref<2x32x128xbf16, #tpu.memory_space<vmem>>, vector<1x32x128xbf16>
    %2 = vector.shape_cast %1 : vector<1x32x128xbf16> to vector<32x128xbf16>
    %3 = vector.extract_strided_slice %2 {offsets = [0, 0], sizes = [32, 96], strides = [1, 1]} : vector<32x128xbf16> to vector<32x96xbf16>
    %c1 = arith.constant 1 : index
    %c0_5 = arith.constant 0 : index
    %c0_6 = arith.constant 0 : index
    %4 = vector.load %arg2[%c1, %c0_5, %c0_6] : memref<2x32x128xbf16, #tpu.memory_space<vmem>>, vector<1x32x128xbf16>
    %5 = vector.shape_cast %4 : vector<1x32x128xbf16> to vector<32x128xbf16>
    %c0_7 = arith.constant 0 : index
    %c0_8 = arith.constant 0 : index
    %6 = vector.load %arg4[%c0_7, %c0_8] : memref<8x128xf32, #tpu.memory_space<vmem>>, vector<1x96xf32>
    %c1_9 = arith.constant 1 : index
    %c0_10 = arith.constant 0 : index
    %7 = vector.load %arg4[%c1_9, %c0_10] : memref<8x128xf32, #tpu.memory_space<vmem>>, vector<1x96xf32>
    %c2 = arith.constant 2 : index
    %c0_11 = arith.constant 0 : index
    %8 = vector.load %arg4[%c2, %c0_11] : memref<8x128xf32, #tpu.memory_space<vmem>>, vector<1x96xf32>
    %c3 = arith.constant 3 : index
    %c0_12 = arith.constant 0 : index
    %9 = vector.load %arg4[%c3, %c0_12] : memref<8x128xf32, #tpu.memory_space<vmem>>, vector<1x128xf32>
    %c4 = arith.constant 4 : index
    %c0_13 = arith.constant 0 : index
    %10 = vector.load %arg4[%c4, %c0_13] : memref<8x128xf32, #tpu.memory_space<vmem>>, vector<1x32xf32>
    %c5 = arith.constant 5 : index
    %c0_14 = arith.constant 0 : index
    %11 = vector.load %arg4[%c5, %c0_14] : memref<8x128xf32, #tpu.memory_space<vmem>>, vector<1x128xf32>
    %c6 = arith.constant 6 : index
    %c0_15 = arith.constant 0 : index
    %12 = vector.load %arg4[%c6, %c0_15] : memref<8x128xf32, #tpu.memory_space<vmem>>, vector<1x1xf32>
    %13 = vector.shape_cast %6 : vector<1x96xf32> to vector<1x1x96xf32>
    %14 = vector.broadcast %0 : vector<4x8x1xf32> to vector<4x8x96xf32>
    %15 = vector.broadcast %13 : vector<1x1x96xf32> to vector<4x8x96xf32>
    %16 = arith.mulf %14, %15 : vector<4x8x96xf32>
    %17 = vector.shape_cast %7 : vector<1x96xf32> to vector<1x1x96xf32>
    %18 = vector.broadcast %17 : vector<1x1x96xf32> to vector<4x8x96xf32>
    %19 = arith.addf %16, %18 : vector<4x8x96xf32>
    %cst = arith.constant 0.000000e+00 : f32
    %20 = vector.broadcast %cst : f32 to vector<4x32xf32>
    %21 = vector.extract_strided_slice %19 {offsets = [0, 0, 0], sizes = [4, 1, 96], strides = [1, 1, 1]} : vector<4x8x96xf32> to vector<4x1x96xf32>
    %22 = vector.shape_cast %21 : vector<4x1x96xf32> to vector<4x96xf32>
    %23 = vector.extract_strided_slice %22 {offsets = [0, 0], sizes = [4, 32], strides = [1, 1]} : vector<4x96xf32> to vector<4x32xf32>
    %24 = vector.extract_strided_slice %8 {offsets = [0, 0], sizes = [1, 32], strides = [1, 1]} : vector<1x96xf32> to vector<1x32xf32>
    %25 = vector.broadcast %24 : vector<1x32xf32> to vector<4x32xf32>
    %26 = arith.addf %23, %25 : vector<4x32xf32>
    %27 = arith.negf %26 : vector<4x32xf32>
    %28 = math.exp %27 : vector<4x32xf32>
    %cst_16 = arith.constant 1.000000e+00 : f32
    %29 = vector.broadcast %cst_16 : f32 to vector<4x32xf32>
    %30 = arith.addf %29, %28 : vector<4x32xf32>
    %31 = arith.divf %29, %30 : vector<4x32xf32>
    %32 = vector.extract_strided_slice %22 {offsets = [0, 32], sizes = [4, 32], strides = [1, 1]} : vector<4x96xf32> to vector<4x32xf32>
    %33 = vector.extract_strided_slice %8 {offsets = [0, 32], sizes = [1, 32], strides = [1, 1]} : vector<1x96xf32> to vector<1x32xf32>
    %34 = vector.broadcast %33 : vector<1x32xf32> to vector<4x32xf32>
    %35 = arith.addf %32, %34 : vector<4x32xf32>
    %36 = arith.negf %35 : vector<4x32xf32>
    %37 = math.exp %36 : vector<4x32xf32>
    %cst_17 = arith.constant 1.000000e+00 : f32
    %38 = vector.broadcast %cst_17 : f32 to vector<4x32xf32>
    %39 = arith.addf %38, %37 : vector<4x32xf32>
    %40 = arith.divf %38, %39 : vector<4x32xf32>
    %41 = vector.extract_strided_slice %22 {offsets = [0, 64], sizes = [4, 32], strides = [1, 1]} : vector<4x96xf32> to vector<4x32xf32>
    %42 = vector.extract_strided_slice %8 {offsets = [0, 64], sizes = [1, 32], strides = [1, 1]} : vector<1x96xf32> to vector<1x32xf32>
    %43 = vector.broadcast %42 : vector<1x32xf32> to vector<4x32xf32>
    %44 = arith.mulf %31, %43 : vector<4x32xf32>
    %45 = arith.addf %41, %44 : vector<4x32xf32>
    %46 = math.tanh %45 : vector<4x32xf32>
    %cst_18 = arith.constant 1.000000e+00 : f32
    %47 = vector.broadcast %cst_18 : f32 to vector<4x32xf32>
    %48 = arith.subf %47, %40 : vector<4x32xf32>
    %49 = arith.mulf %48, %46 : vector<4x32xf32>
    %50 = arith.mulf %40, %20 : vector<4x32xf32>
    %51 = arith.addf %49, %50 : vector<4x32xf32>
    %52 = arith.truncf %51 : vector<4x32xf32> to vector<4x32xbf16>
    %cst_19 = arith.constant dense<0.000000e+00> : vector<4x96xf32>
    %53 = tpu.matmul %52, %3, %cst_19 {dimension_numbers = #tpu.dot_dimension_numbers<[1], [0], [0], [1], [0, 0, 1, 1], [], []>} : vector<4x32xbf16>, vector<32x96xbf16>, vector<4x96xf32> -> vector<4x96xf32>
    %54 = vector.broadcast %8 : vector<1x96xf32> to vector<4x96xf32>
    %55 = arith.addf %53, %54 : vector<4x96xf32>
    %56 = vector.extract_strided_slice %19 {offsets = [0, 1, 0], sizes = [4, 1, 96], strides = [1, 1, 1]} : vector<4x8x96xf32> to vector<4x1x96xf32>
    %57 = vector.shape_cast %56 : vector<4x1x96xf32> to vector<4x96xf32>
    %58 = vector.extract_strided_slice %57 {offsets = [0, 0], sizes = [4, 32], strides = [1, 1]} : vector<4x96xf32> to vector<4x32xf32>
    %59 = vector.extract_strided_slice %55 {offsets = [0, 0], sizes = [4, 32], strides = [1, 1]} : vector<4x96xf32> to vector<4x32xf32>
    %60 = arith.addf %58, %59 : vector<4x32xf32>
    %61 = arith.negf %60 : vector<4x32xf32>
    %62 = math.exp %61 : vector<4x32xf32>
    %cst_20 = arith.constant 1.000000e+00 : f32
    %63 = vector.broadcast %cst_20 : f32 to vector<4x32xf32>
    %64 = arith.addf %63, %62 : vector<4x32xf32>
    %65 = arith.divf %63, %64 : vector<4x32xf32>
    %66 = vector.extract_strided_slice %57 {offsets = [0, 32], sizes = [4, 32], strides = [1, 1]} : vector<4x96xf32> to vector<4x32xf32>
    %67 = vector.extract_strided_slice %55 {offsets = [0, 32], sizes = [4, 32], strides = [1, 1]} : vector<4x96xf32> to vector<4x32xf32>
    %68 = arith.addf %66, %67 : vector<4x32xf32>
    %69 = arith.negf %68 : vector<4x32xf32>
    %70 = math.exp %69 : vector<4x32xf32>
    %cst_21 = arith.constant 1.000000e+00 : f32
    %71 = vector.broadcast %cst_21 : f32 to vector<4x32xf32>
    %72 = arith.addf %71, %70 : vector<4x32xf32>
    %73 = arith.divf %71, %72 : vector<4x32xf32>
    %74 = vector.extract_strided_slice %57 {offsets = [0, 64], sizes = [4, 32], strides = [1, 1]} : vector<4x96xf32> to vector<4x32xf32>
    %75 = vector.extract_strided_slice %55 {offsets = [0, 64], sizes = [4, 32], strides = [1, 1]} : vector<4x96xf32> to vector<4x32xf32>
    %76 = arith.mulf %65, %75 : vector<4x32xf32>
    %77 = arith.addf %74, %76 : vector<4x32xf32>
    %78 = math.tanh %77 : vector<4x32xf32>
    %cst_22 = arith.constant 1.000000e+00 : f32
    %79 = vector.broadcast %cst_22 : f32 to vector<4x32xf32>
    %80 = arith.subf %79, %73 : vector<4x32xf32>
    %81 = arith.mulf %80, %78 : vector<4x32xf32>
    %82 = arith.mulf %73, %51 : vector<4x32xf32>
    %83 = arith.addf %81, %82 : vector<4x32xf32>
    %84 = arith.truncf %83 : vector<4x32xf32> to vector<4x32xbf16>
    %cst_23 = arith.constant dense<0.000000e+00> : vector<4x96xf32>
    %85 = tpu.matmul %84, %3, %cst_23 {dimension_numbers = #tpu.dot_dimension_numbers<[1], [0], [0], [1], [0, 0, 1, 1], [], []>} : vector<4x32xbf16>, vector<32x96xbf16>, vector<4x96xf32> -> vector<4x96xf32>
    %86 = vector.broadcast %8 : vector<1x96xf32> to vector<4x96xf32>
    %87 = arith.addf %85, %86 : vector<4x96xf32>
    %88 = vector.extract_strided_slice %19 {offsets = [0, 2, 0], sizes = [4, 1, 96], strides = [1, 1, 1]} : vector<4x8x96xf32> to vector<4x1x96xf32>
    %89 = vector.shape_cast %88 : vector<4x1x96xf32> to vector<4x96xf32>
    %90 = vector.extract_strided_slice %89 {offsets = [0, 0], sizes = [4, 32], strides = [1, 1]} : vector<4x96xf32> to vector<4x32xf32>
    %91 = vector.extract_strided_slice %87 {offsets = [0, 0], sizes = [4, 32], strides = [1, 1]} : vector<4x96xf32> to vector<4x32xf32>
    %92 = arith.addf %90, %91 : vector<4x32xf32>
    %93 = arith.negf %92 : vector<4x32xf32>
    %94 = math.exp %93 : vector<4x32xf32>
    %cst_24 = arith.constant 1.000000e+00 : f32
    %95 = vector.broadcast %cst_24 : f32 to vector<4x32xf32>
    %96 = arith.addf %95, %94 : vector<4x32xf32>
    %97 = arith.divf %95, %96 : vector<4x32xf32>
    %98 = vector.extract_strided_slice %89 {offsets = [0, 32], sizes = [4, 32], strides = [1, 1]} : vector<4x96xf32> to vector<4x32xf32>
    %99 = vector.extract_strided_slice %87 {offsets = [0, 32], sizes = [4, 32], strides = [1, 1]} : vector<4x96xf32> to vector<4x32xf32>
    %100 = arith.addf %98, %99 : vector<4x32xf32>
    %101 = arith.negf %100 : vector<4x32xf32>
    %102 = math.exp %101 : vector<4x32xf32>
    %cst_25 = arith.constant 1.000000e+00 : f32
    %103 = vector.broadcast %cst_25 : f32 to vector<4x32xf32>
    %104 = arith.addf %103, %102 : vector<4x32xf32>
    %105 = arith.divf %103, %104 : vector<4x32xf32>
    %106 = vector.extract_strided_slice %89 {offsets = [0, 64], sizes = [4, 32], strides = [1, 1]} : vector<4x96xf32> to vector<4x32xf32>
    %107 = vector.extract_strided_slice %87 {offsets = [0, 64], sizes = [4, 32], strides = [1, 1]} : vector<4x96xf32> to vector<4x32xf32>
    %108 = arith.mulf %97, %107 : vector<4x32xf32>
    %109 = arith.addf %106, %108 : vector<4x32xf32>
    %110 = math.tanh %109 : vector<4x32xf32>
    %cst_26 = arith.constant 1.000000e+00 : f32
    %111 = vector.broadcast %cst_26 : f32 to vector<4x32xf32>
    %112 = arith.subf %111, %105 : vector<4x32xf32>
    %113 = arith.mulf %112, %110 : vector<4x32xf32>
    %114 = arith.mulf %105, %83 : vector<4x32xf32>
    %115 = arith.addf %113, %114 : vector<4x32xf32>
    %116 = arith.truncf %115 : vector<4x32xf32> to vector<4x32xbf16>
    %cst_27 = arith.constant dense<0.000000e+00> : vector<4x96xf32>
    %117 = tpu.matmul %116, %3, %cst_27 {dimension_numbers = #tpu.dot_dimension_numbers<[1], [0], [0], [1], [0, 0, 1, 1], [], []>} : vector<4x32xbf16>, vector<32x96xbf16>, vector<4x96xf32> -> vector<4x96xf32>
    %118 = vector.broadcast %8 : vector<1x96xf32> to vector<4x96xf32>
    %119 = arith.addf %117, %118 : vector<4x96xf32>
    %120 = vector.extract_strided_slice %19 {offsets = [0, 3, 0], sizes = [4, 1, 96], strides = [1, 1, 1]} : vector<4x8x96xf32> to vector<4x1x96xf32>
    %121 = vector.shape_cast %120 : vector<4x1x96xf32> to vector<4x96xf32>
    %122 = vector.extract_strided_slice %121 {offsets = [0, 0], sizes = [4, 32], strides = [1, 1]} : vector<4x96xf32> to vector<4x32xf32>
    %123 = vector.extract_strided_slice %119 {offsets = [0, 0], sizes = [4, 32], strides = [1, 1]} : vector<4x96xf32> to vector<4x32xf32>
    %124 = arith.addf %122, %123 : vector<4x32xf32>
    %125 = arith.negf %124 : vector<4x32xf32>
    %126 = math.exp %125 : vector<4x32xf32>
    %cst_28 = arith.constant 1.000000e+00 : f32
    %127 = vector.broadcast %cst_28 : f32 to vector<4x32xf32>
    %128 = arith.addf %127, %126 : vector<4x32xf32>
    %129 = arith.divf %127, %128 : vector<4x32xf32>
    %130 = vector.extract_strided_slice %121 {offsets = [0, 32], sizes = [4, 32], strides = [1, 1]} : vector<4x96xf32> to vector<4x32xf32>
    %131 = vector.extract_strided_slice %119 {offsets = [0, 32], sizes = [4, 32], strides = [1, 1]} : vector<4x96xf32> to vector<4x32xf32>
    %132 = arith.addf %130, %131 : vector<4x32xf32>
    %133 = arith.negf %132 : vector<4x32xf32>
    %134 = math.exp %133 : vector<4x32xf32>
    %cst_29 = arith.constant 1.000000e+00 : f32
    %135 = vector.broadcast %cst_29 : f32 to vector<4x32xf32>
    %136 = arith.addf %135, %134 : vector<4x32xf32>
    %137 = arith.divf %135, %136 : vector<4x32xf32>
    %138 = vector.extract_strided_slice %121 {offsets = [0, 64], sizes = [4, 32], strides = [1, 1]} : vector<4x96xf32> to vector<4x32xf32>
    %139 = vector.extract_strided_slice %119 {offsets = [0, 64], sizes = [4, 32], strides = [1, 1]} : vector<4x96xf32> to vector<4x32xf32>
    %140 = arith.mulf %129, %139 : vector<4x32xf32>
    %141 = arith.addf %138, %140 : vector<4x32xf32>
    %142 = math.tanh %141 : vector<4x32xf32>
    %cst_30 = arith.constant 1.000000e+00 : f32
    %143 = vector.broadcast %cst_30 : f32 to vector<4x32xf32>
    %144 = arith.subf %143, %137 : vector<4x32xf32>
    %145 = arith.mulf %144, %142 : vector<4x32xf32>
    %146 = arith.mulf %137, %115 : vector<4x32xf32>
    %147 = arith.addf %145, %146 : vector<4x32xf32>
    %148 = arith.truncf %147 : vector<4x32xf32> to vector<4x32xbf16>
    %cst_31 = arith.constant dense<0.000000e+00> : vector<4x96xf32>
    %149 = tpu.matmul %148, %3, %cst_31 {dimension_numbers = #tpu.dot_dimension_numbers<[1], [0], [0], [1], [0, 0, 1, 1], [], []>} : vector<4x32xbf16>, vector<32x96xbf16>, vector<4x96xf32> -> vector<4x96xf32>
    %150 = vector.broadcast %8 : vector<1x96xf32> to vector<4x96xf32>
    %151 = arith.addf %149, %150 : vector<4x96xf32>
    %152 = vector.extract_strided_slice %19 {offsets = [0, 4, 0], sizes = [4, 1, 96], strides = [1, 1, 1]} : vector<4x8x96xf32> to vector<4x1x96xf32>
    %153 = vector.shape_cast %152 : vector<4x1x96xf32> to vector<4x96xf32>
    %154 = vector.extract_strided_slice %153 {offsets = [0, 0], sizes = [4, 32], strides = [1, 1]} : vector<4x96xf32> to vector<4x32xf32>
    %155 = vector.extract_strided_slice %151 {offsets = [0, 0], sizes = [4, 32], strides = [1, 1]} : vector<4x96xf32> to vector<4x32xf32>
    %156 = arith.addf %154, %155 : vector<4x32xf32>
    %157 = arith.negf %156 : vector<4x32xf32>
    %158 = math.exp %157 : vector<4x32xf32>
    %cst_32 = arith.constant 1.000000e+00 : f32
    %159 = vector.broadcast %cst_32 : f32 to vector<4x32xf32>
    %160 = arith.addf %159, %158 : vector<4x32xf32>
    %161 = arith.divf %159, %160 : vector<4x32xf32>
    %162 = vector.extract_strided_slice %153 {offsets = [0, 32], sizes = [4, 32], strides = [1, 1]} : vector<4x96xf32> to vector<4x32xf32>
    %163 = vector.extract_strided_slice %151 {offsets = [0, 32], sizes = [4, 32], strides = [1, 1]} : vector<4x96xf32> to vector<4x32xf32>
    %164 = arith.addf %162, %163 : vector<4x32xf32>
    %165 = arith.negf %164 : vector<4x32xf32>
    %166 = math.exp %165 : vector<4x32xf32>
    %cst_33 = arith.constant 1.000000e+00 : f32
    %167 = vector.broadcast %cst_33 : f32 to vector<4x32xf32>
    %168 = arith.addf %167, %166 : vector<4x32xf32>
    %169 = arith.divf %167, %168 : vector<4x32xf32>
    %170 = vector.extract_strided_slice %153 {offsets = [0, 64], sizes = [4, 32], strides = [1, 1]} : vector<4x96xf32> to vector<4x32xf32>
    %171 = vector.extract_strided_slice %151 {offsets = [0, 64], sizes = [4, 32], strides = [1, 1]} : vector<4x96xf32> to vector<4x32xf32>
    %172 = arith.mulf %161, %171 : vector<4x32xf32>
    %173 = arith.addf %170, %172 : vector<4x32xf32>
    %174 = math.tanh %173 : vector<4x32xf32>
    %cst_34 = arith.constant 1.000000e+00 : f32
    %175 = vector.broadcast %cst_34 : f32 to vector<4x32xf32>
    %176 = arith.subf %175, %169 : vector<4x32xf32>
    %177 = arith.mulf %176, %174 : vector<4x32xf32>
    %178 = arith.mulf %169, %147 : vector<4x32xf32>
    %179 = arith.addf %177, %178 : vector<4x32xf32>
    %180 = arith.truncf %179 : vector<4x32xf32> to vector<4x32xbf16>
    %cst_35 = arith.constant dense<0.000000e+00> : vector<4x96xf32>
    %181 = tpu.matmul %180, %3, %cst_35 {dimension_numbers = #tpu.dot_dimension_numbers<[1], [0], [0], [1], [0, 0, 1, 1], [], []>} : vector<4x32xbf16>, vector<32x96xbf16>, vector<4x96xf32> -> vector<4x96xf32>
    %182 = vector.broadcast %8 : vector<1x96xf32> to vector<4x96xf32>
    %183 = arith.addf %181, %182 : vector<4x96xf32>
    %184 = vector.extract_strided_slice %19 {offsets = [0, 5, 0], sizes = [4, 1, 96], strides = [1, 1, 1]} : vector<4x8x96xf32> to vector<4x1x96xf32>
    %185 = vector.shape_cast %184 : vector<4x1x96xf32> to vector<4x96xf32>
    %186 = vector.extract_strided_slice %185 {offsets = [0, 0], sizes = [4, 32], strides = [1, 1]} : vector<4x96xf32> to vector<4x32xf32>
    %187 = vector.extract_strided_slice %183 {offsets = [0, 0], sizes = [4, 32], strides = [1, 1]} : vector<4x96xf32> to vector<4x32xf32>
    %188 = arith.addf %186, %187 : vector<4x32xf32>
    %189 = arith.negf %188 : vector<4x32xf32>
    %190 = math.exp %189 : vector<4x32xf32>
    %cst_36 = arith.constant 1.000000e+00 : f32
    %191 = vector.broadcast %cst_36 : f32 to vector<4x32xf32>
    %192 = arith.addf %191, %190 : vector<4x32xf32>
    %193 = arith.divf %191, %192 : vector<4x32xf32>
    %194 = vector.extract_strided_slice %185 {offsets = [0, 32], sizes = [4, 32], strides = [1, 1]} : vector<4x96xf32> to vector<4x32xf32>
    %195 = vector.extract_strided_slice %183 {offsets = [0, 32], sizes = [4, 32], strides = [1, 1]} : vector<4x96xf32> to vector<4x32xf32>
    %196 = arith.addf %194, %195 : vector<4x32xf32>
    %197 = arith.negf %196 : vector<4x32xf32>
    %198 = math.exp %197 : vector<4x32xf32>
    %cst_37 = arith.constant 1.000000e+00 : f32
    %199 = vector.broadcast %cst_37 : f32 to vector<4x32xf32>
    %200 = arith.addf %199, %198 : vector<4x32xf32>
    %201 = arith.divf %199, %200 : vector<4x32xf32>
    %202 = vector.extract_strided_slice %185 {offsets = [0, 64], sizes = [4, 32], strides = [1, 1]} : vector<4x96xf32> to vector<4x32xf32>
    %203 = vector.extract_strided_slice %183 {offsets = [0, 64], sizes = [4, 32], strides = [1, 1]} : vector<4x96xf32> to vector<4x32xf32>
    %204 = arith.mulf %193, %203 : vector<4x32xf32>
    %205 = arith.addf %202, %204 : vector<4x32xf32>
    %206 = math.tanh %205 : vector<4x32xf32>
    %cst_38 = arith.constant 1.000000e+00 : f32
    %207 = vector.broadcast %cst_38 : f32 to vector<4x32xf32>
    %208 = arith.subf %207, %201 : vector<4x32xf32>
    %209 = arith.mulf %208, %206 : vector<4x32xf32>
    %210 = arith.mulf %201, %179 : vector<4x32xf32>
    %211 = arith.addf %209, %210 : vector<4x32xf32>
    %212 = arith.truncf %211 : vector<4x32xf32> to vector<4x32xbf16>
    %cst_39 = arith.constant dense<0.000000e+00> : vector<4x96xf32>
    %213 = tpu.matmul %212, %3, %cst_39 {dimension_numbers = #tpu.dot_dimension_numbers<[1], [0], [0], [1], [0, 0, 1, 1], [], []>} : vector<4x32xbf16>, vector<32x96xbf16>, vector<4x96xf32> -> vector<4x96xf32>
    %214 = vector.broadcast %8 : vector<1x96xf32> to vector<4x96xf32>
    %215 = arith.addf %213, %214 : vector<4x96xf32>
    %216 = vector.extract_strided_slice %19 {offsets = [0, 6, 0], sizes = [4, 1, 96], strides = [1, 1, 1]} : vector<4x8x96xf32> to vector<4x1x96xf32>
    %217 = vector.shape_cast %216 : vector<4x1x96xf32> to vector<4x96xf32>
    %218 = vector.extract_strided_slice %217 {offsets = [0, 0], sizes = [4, 32], strides = [1, 1]} : vector<4x96xf32> to vector<4x32xf32>
    %219 = vector.extract_strided_slice %215 {offsets = [0, 0], sizes = [4, 32], strides = [1, 1]} : vector<4x96xf32> to vector<4x32xf32>
    %220 = arith.addf %218, %219 : vector<4x32xf32>
    %221 = arith.negf %220 : vector<4x32xf32>
    %222 = math.exp %221 : vector<4x32xf32>
    %cst_40 = arith.constant 1.000000e+00 : f32
    %223 = vector.broadcast %cst_40 : f32 to vector<4x32xf32>
    %224 = arith.addf %223, %222 : vector<4x32xf32>
    %225 = arith.divf %223, %224 : vector<4x32xf32>
    %226 = vector.extract_strided_slice %217 {offsets = [0, 32], sizes = [4, 32], strides = [1, 1]} : vector<4x96xf32> to vector<4x32xf32>
    %227 = vector.extract_strided_slice %215 {offsets = [0, 32], sizes = [4, 32], strides = [1, 1]} : vector<4x96xf32> to vector<4x32xf32>
    %228 = arith.addf %226, %227 : vector<4x32xf32>
    %229 = arith.negf %228 : vector<4x32xf32>
    %230 = math.exp %229 : vector<4x32xf32>
    %cst_41 = arith.constant 1.000000e+00 : f32
    %231 = vector.broadcast %cst_41 : f32 to vector<4x32xf32>
    %232 = arith.addf %231, %230 : vector<4x32xf32>
    %233 = arith.divf %231, %232 : vector<4x32xf32>
    %234 = vector.extract_strided_slice %217 {offsets = [0, 64], sizes = [4, 32], strides = [1, 1]} : vector<4x96xf32> to vector<4x32xf32>
    %235 = vector.extract_strided_slice %215 {offsets = [0, 64], sizes = [4, 32], strides = [1, 1]} : vector<4x96xf32> to vector<4x32xf32>
    %236 = arith.mulf %225, %235 : vector<4x32xf32>
    %237 = arith.addf %234, %236 : vector<4x32xf32>
    %238 = math.tanh %237 : vector<4x32xf32>
    %cst_42 = arith.constant 1.000000e+00 : f32
    %239 = vector.broadcast %cst_42 : f32 to vector<4x32xf32>
    %240 = arith.subf %239, %233 : vector<4x32xf32>
    %241 = arith.mulf %240, %238 : vector<4x32xf32>
    %242 = arith.mulf %233, %211 : vector<4x32xf32>
    %243 = arith.addf %241, %242 : vector<4x32xf32>
    %244 = arith.truncf %243 : vector<4x32xf32> to vector<4x32xbf16>
    %cst_43 = arith.constant dense<0.000000e+00> : vector<4x96xf32>
    %245 = tpu.matmul %244, %3, %cst_43 {dimension_numbers = #tpu.dot_dimension_numbers<[1], [0], [0], [1], [0, 0, 1, 1], [], []>} : vector<4x32xbf16>, vector<32x96xbf16>, vector<4x96xf32> -> vector<4x96xf32>
    %246 = vector.broadcast %8 : vector<1x96xf32> to vector<4x96xf32>
    %247 = arith.addf %245, %246 : vector<4x96xf32>
    %248 = vector.extract_strided_slice %19 {offsets = [0, 7, 0], sizes = [4, 1, 96], strides = [1, 1, 1]} : vector<4x8x96xf32> to vector<4x1x96xf32>
    %249 = vector.shape_cast %248 : vector<4x1x96xf32> to vector<4x96xf32>
    %250 = vector.extract_strided_slice %249 {offsets = [0, 0], sizes = [4, 32], strides = [1, 1]} : vector<4x96xf32> to vector<4x32xf32>
    %251 = vector.extract_strided_slice %247 {offsets = [0, 0], sizes = [4, 32], strides = [1, 1]} : vector<4x96xf32> to vector<4x32xf32>
    %252 = arith.addf %250, %251 : vector<4x32xf32>
    %253 = arith.negf %252 : vector<4x32xf32>
    %254 = math.exp %253 : vector<4x32xf32>
    %cst_44 = arith.constant 1.000000e+00 : f32
    %255 = vector.broadcast %cst_44 : f32 to vector<4x32xf32>
    %256 = arith.addf %255, %254 : vector<4x32xf32>
    %257 = arith.divf %255, %256 : vector<4x32xf32>
    %258 = vector.extract_strided_slice %249 {offsets = [0, 32], sizes = [4, 32], strides = [1, 1]} : vector<4x96xf32> to vector<4x32xf32>
    %259 = vector.extract_strided_slice %247 {offsets = [0, 32], sizes = [4, 32], strides = [1, 1]} : vector<4x96xf32> to vector<4x32xf32>
    %260 = arith.addf %258, %259 : vector<4x32xf32>
    %261 = arith.negf %260 : vector<4x32xf32>
    %262 = math.exp %261 : vector<4x32xf32>
    %cst_45 = arith.constant 1.000000e+00 : f32
    %263 = vector.broadcast %cst_45 : f32 to vector<4x32xf32>
    %264 = arith.addf %263, %262 : vector<4x32xf32>
    %265 = arith.divf %263, %264 : vector<4x32xf32>
    %266 = vector.extract_strided_slice %249 {offsets = [0, 64], sizes = [4, 32], strides = [1, 1]} : vector<4x96xf32> to vector<4x32xf32>
    %267 = vector.extract_strided_slice %247 {offsets = [0, 64], sizes = [4, 32], strides = [1, 1]} : vector<4x96xf32> to vector<4x32xf32>
    %268 = arith.mulf %257, %267 : vector<4x32xf32>
    %269 = arith.addf %266, %268 : vector<4x32xf32>
    %270 = math.tanh %269 : vector<4x32xf32>
    %cst_46 = arith.constant 1.000000e+00 : f32
    %271 = vector.broadcast %cst_46 : f32 to vector<4x32xf32>
    %272 = arith.subf %271, %265 : vector<4x32xf32>
    %273 = arith.mulf %272, %270 : vector<4x32xf32>
    %274 = arith.mulf %265, %243 : vector<4x32xf32>
    %275 = arith.addf %273, %274 : vector<4x32xf32>
    %c0_47 = arith.constant 0 : index
    %c0_48 = arith.constant 0 : index
    %276 = vector.load %arg1[%c0_47, %c0_48] : memref<32x12xf32, #tpu.memory_space<vmem>>, vector<32x12xf32>
    %c0_49 = arith.constant 0 : index
    %c0_50 = arith.constant 0 : index
    %277 = vector.load %arg3[%c0_49, %c0_50] : memref<12x128xf32, #tpu.memory_space<vmem>>, vector<12x128xf32>
    %cst_51 = arith.constant dense<0.000000e+00> : vector<32x128xf32>
    %278 = tpu.matmul %276, %277, %cst_51 {dimension_numbers = #tpu.dot_dimension_numbers<[1], [0], [0], [1], [0, 0, 1, 1], [], []>} : vector<32x12xf32>, vector<12x128xf32>, vector<32x128xf32> -> vector<32x128xf32>
    %279 = vector.broadcast %11 : vector<1x128xf32> to vector<32x128xf32>
    %280 = arith.addf %278, %279 : vector<32x128xf32>
    %281 = vector.shape_cast %280 : vector<32x128xf32> to vector<4x8x128xf32>
    %282 = vector.extract_strided_slice %0 {offsets = [0, 7, 0], sizes = [4, 1, 1], strides = [1, 1, 1]} : vector<4x8x1xf32> to vector<4x1x1xf32>
    %283 = vector.shape_cast %282 : vector<4x1x1xf32> to vector<4x1xf32>
    %284 = vector.broadcast %10 : vector<1x32xf32> to vector<4x32xf32>
    %285 = arith.mulf %275, %284 : vector<4x32xf32>
    %cst_52 = arith.constant dense<0.000000e+00> : vector<4xf32>
    %286 = vector.multi_reduction <add>, %285, %cst_52 [1] : vector<4x32xf32> to vector<4xf32>
    %287 = vector.shape_cast %286 : vector<4xf32> to vector<4x1xf32>
    %288 = vector.broadcast %12 : vector<1x1xf32> to vector<4x1xf32>
    %289 = arith.addf %287, %288 : vector<4x1xf32>
    %290 = arith.subf %283, %289 : vector<4x1xf32>
    %291 = vector.broadcast %290 : vector<4x1xf32> to vector<4x128xf32>
    %292 = vector.broadcast %9 : vector<1x128xf32> to vector<4x128xf32>
    %293 = arith.mulf %291, %292 : vector<4x128xf32>
    %294 = arith.truncf %275 : vector<4x32xf32> to vector<4x32xbf16>
    %cst_53 = arith.constant dense<0.000000e+00> : vector<4x128xf32>
    %295 = tpu.matmul %294, %5, %cst_53 {dimension_numbers = #tpu.dot_dimension_numbers<[1], [0], [0], [1], [0, 0, 1, 1], [], []>} : vector<4x32xbf16>, vector<32x128xbf16>, vector<4x128xf32> -> vector<4x128xf32>
    %296 = vector.extract_strided_slice %281 {offsets = [0, 0, 0], sizes = [4, 1, 128], strides = [1, 1, 1]} : vector<4x8x128xf32> to vector<4x1x128xf32>
    %297 = vector.shape_cast %296 : vector<4x1x128xf32> to vector<4x128xf32>
    %298 = arith.addf %295, %297 : vector<4x128xf32>
    %299 = arith.addf %298, %293 : vector<4x128xf32>
    %300 = vector.extract_strided_slice %299 {offsets = [0, 0], sizes = [4, 32], strides = [1, 1]} : vector<4x128xf32> to vector<4x32xf32>
    %301 = arith.negf %300 : vector<4x32xf32>
    %302 = math.exp %301 : vector<4x32xf32>
    %cst_54 = arith.constant 1.000000e+00 : f32
    %303 = vector.broadcast %cst_54 : f32 to vector<4x32xf32>
    %304 = arith.addf %303, %302 : vector<4x32xf32>
    %305 = arith.divf %303, %304 : vector<4x32xf32>
    %306 = vector.extract_strided_slice %299 {offsets = [0, 32], sizes = [4, 32], strides = [1, 1]} : vector<4x128xf32> to vector<4x32xf32>
    %307 = arith.negf %306 : vector<4x32xf32>
    %308 = math.exp %307 : vector<4x32xf32>
    %cst_55 = arith.constant 1.000000e+00 : f32
    %309 = vector.broadcast %cst_55 : f32 to vector<4x32xf32>
    %310 = arith.addf %309, %308 : vector<4x32xf32>
    %311 = arith.divf %309, %310 : vector<4x32xf32>
    %312 = vector.extract_strided_slice %299 {offsets = [0, 64], sizes = [4, 32], strides = [1, 1]} : vector<4x128xf32> to vector<4x32xf32>
    %313 = vector.extract_strided_slice %299 {offsets = [0, 96], sizes = [4, 32], strides = [1, 1]} : vector<4x128xf32> to vector<4x32xf32>
    %314 = arith.mulf %305, %313 : vector<4x32xf32>
    %315 = arith.addf %312, %314 : vector<4x32xf32>
    %316 = math.tanh %315 : vector<4x32xf32>
    %cst_56 = arith.constant 1.000000e+00 : f32
    %317 = vector.broadcast %cst_56 : f32 to vector<4x32xf32>
    %318 = arith.subf %317, %311 : vector<4x32xf32>
    %319 = arith.mulf %318, %316 : vector<4x32xf32>
    %320 = arith.mulf %311, %275 : vector<4x32xf32>
    %321 = arith.addf %319, %320 : vector<4x32xf32>
    %322 = arith.truncf %321 : vector<4x32xf32> to vector<4x32xbf16>
    %cst_57 = arith.constant dense<0.000000e+00> : vector<4x128xf32>
    %323 = tpu.matmul %322, %5, %cst_57 {dimension_numbers = #tpu.dot_dimension_numbers<[1], [0], [0], [1], [0, 0, 1, 1], [], []>} : vector<4x32xbf16>, vector<32x128xbf16>, vector<4x128xf32> -> vector<4x128xf32>
    %324 = vector.extract_strided_slice %281 {offsets = [0, 1, 0], sizes = [4, 1, 128], strides = [1, 1, 1]} : vector<4x8x128xf32> to vector<4x1x128xf32>
    %325 = vector.shape_cast %324 : vector<4x1x128xf32> to vector<4x128xf32>
    %326 = arith.addf %323, %325 : vector<4x128xf32>
    %327 = vector.extract_strided_slice %326 {offsets = [0, 0], sizes = [4, 32], strides = [1, 1]} : vector<4x128xf32> to vector<4x32xf32>
    %328 = arith.negf %327 : vector<4x32xf32>
    %329 = math.exp %328 : vector<4x32xf32>
    %cst_58 = arith.constant 1.000000e+00 : f32
    %330 = vector.broadcast %cst_58 : f32 to vector<4x32xf32>
    %331 = arith.addf %330, %329 : vector<4x32xf32>
    %332 = arith.divf %330, %331 : vector<4x32xf32>
    %333 = vector.extract_strided_slice %326 {offsets = [0, 32], sizes = [4, 32], strides = [1, 1]} : vector<4x128xf32> to vector<4x32xf32>
    %334 = arith.negf %333 : vector<4x32xf32>
    %335 = math.exp %334 : vector<4x32xf32>
    %cst_59 = arith.constant 1.000000e+00 : f32
    %336 = vector.broadcast %cst_59 : f32 to vector<4x32xf32>
    %337 = arith.addf %336, %335 : vector<4x32xf32>
    %338 = arith.divf %336, %337 : vector<4x32xf32>
    %339 = vector.extract_strided_slice %326 {offsets = [0, 64], sizes = [4, 32], strides = [1, 1]} : vector<4x128xf32> to vector<4x32xf32>
    %340 = vector.extract_strided_slice %326 {offsets = [0, 96], sizes = [4, 32], strides = [1, 1]} : vector<4x128xf32> to vector<4x32xf32>
    %341 = arith.mulf %332, %340 : vector<4x32xf32>
    %342 = arith.addf %339, %341 : vector<4x32xf32>
    %343 = math.tanh %342 : vector<4x32xf32>
    %cst_60 = arith.constant 1.000000e+00 : f32
    %344 = vector.broadcast %cst_60 : f32 to vector<4x32xf32>
    %345 = arith.subf %344, %338 : vector<4x32xf32>
    %346 = arith.mulf %345, %343 : vector<4x32xf32>
    %347 = arith.mulf %338, %321 : vector<4x32xf32>
    %348 = arith.addf %346, %347 : vector<4x32xf32>
    %349 = arith.truncf %348 : vector<4x32xf32> to vector<4x32xbf16>
    %cst_61 = arith.constant dense<0.000000e+00> : vector<4x128xf32>
    %350 = tpu.matmul %349, %5, %cst_61 {dimension_numbers = #tpu.dot_dimension_numbers<[1], [0], [0], [1], [0, 0, 1, 1], [], []>} : vector<4x32xbf16>, vector<32x128xbf16>, vector<4x128xf32> -> vector<4x128xf32>
    %351 = vector.extract_strided_slice %281 {offsets = [0, 2, 0], sizes = [4, 1, 128], strides = [1, 1, 1]} : vector<4x8x128xf32> to vector<4x1x128xf32>
    %352 = vector.shape_cast %351 : vector<4x1x128xf32> to vector<4x128xf32>
    %353 = arith.addf %350, %352 : vector<4x128xf32>
    %354 = vector.extract_strided_slice %353 {offsets = [0, 0], sizes = [4, 32], strides = [1, 1]} : vector<4x128xf32> to vector<4x32xf32>
    %355 = arith.negf %354 : vector<4x32xf32>
    %356 = math.exp %355 : vector<4x32xf32>
    %cst_62 = arith.constant 1.000000e+00 : f32
    %357 = vector.broadcast %cst_62 : f32 to vector<4x32xf32>
    %358 = arith.addf %357, %356 : vector<4x32xf32>
    %359 = arith.divf %357, %358 : vector<4x32xf32>
    %360 = vector.extract_strided_slice %353 {offsets = [0, 32], sizes = [4, 32], strides = [1, 1]} : vector<4x128xf32> to vector<4x32xf32>
    %361 = arith.negf %360 : vector<4x32xf32>
    %362 = math.exp %361 : vector<4x32xf32>
    %cst_63 = arith.constant 1.000000e+00 : f32
    %363 = vector.broadcast %cst_63 : f32 to vector<4x32xf32>
    %364 = arith.addf %363, %362 : vector<4x32xf32>
    %365 = arith.divf %363, %364 : vector<4x32xf32>
    %366 = vector.extract_strided_slice %353 {offsets = [0, 64], sizes = [4, 32], strides = [1, 1]} : vector<4x128xf32> to vector<4x32xf32>
    %367 = vector.extract_strided_slice %353 {offsets = [0, 96], sizes = [4, 32], strides = [1, 1]} : vector<4x128xf32> to vector<4x32xf32>
    %368 = arith.mulf %359, %367 : vector<4x32xf32>
    %369 = arith.addf %366, %368 : vector<4x32xf32>
    %370 = math.tanh %369 : vector<4x32xf32>
    %cst_64 = arith.constant 1.000000e+00 : f32
    %371 = vector.broadcast %cst_64 : f32 to vector<4x32xf32>
    %372 = arith.subf %371, %365 : vector<4x32xf32>
    %373 = arith.mulf %372, %370 : vector<4x32xf32>
    %374 = arith.mulf %365, %348 : vector<4x32xf32>
    %375 = arith.addf %373, %374 : vector<4x32xf32>
    %376 = arith.truncf %375 : vector<4x32xf32> to vector<4x32xbf16>
    %cst_65 = arith.constant dense<0.000000e+00> : vector<4x128xf32>
    %377 = tpu.matmul %376, %5, %cst_65 {dimension_numbers = #tpu.dot_dimension_numbers<[1], [0], [0], [1], [0, 0, 1, 1], [], []>} : vector<4x32xbf16>, vector<32x128xbf16>, vector<4x128xf32> -> vector<4x128xf32>
    %378 = vector.extract_strided_slice %281 {offsets = [0, 3, 0], sizes = [4, 1, 128], strides = [1, 1, 1]} : vector<4x8x128xf32> to vector<4x1x128xf32>
    %379 = vector.shape_cast %378 : vector<4x1x128xf32> to vector<4x128xf32>
    %380 = arith.addf %377, %379 : vector<4x128xf32>
    %381 = vector.extract_strided_slice %380 {offsets = [0, 0], sizes = [4, 32], strides = [1, 1]} : vector<4x128xf32> to vector<4x32xf32>
    %382 = arith.negf %381 : vector<4x32xf32>
    %383 = math.exp %382 : vector<4x32xf32>
    %cst_66 = arith.constant 1.000000e+00 : f32
    %384 = vector.broadcast %cst_66 : f32 to vector<4x32xf32>
    %385 = arith.addf %384, %383 : vector<4x32xf32>
    %386 = arith.divf %384, %385 : vector<4x32xf32>
    %387 = vector.extract_strided_slice %380 {offsets = [0, 32], sizes = [4, 32], strides = [1, 1]} : vector<4x128xf32> to vector<4x32xf32>
    %388 = arith.negf %387 : vector<4x32xf32>
    %389 = math.exp %388 : vector<4x32xf32>
    %cst_67 = arith.constant 1.000000e+00 : f32
    %390 = vector.broadcast %cst_67 : f32 to vector<4x32xf32>
    %391 = arith.addf %390, %389 : vector<4x32xf32>
    %392 = arith.divf %390, %391 : vector<4x32xf32>
    %393 = vector.extract_strided_slice %380 {offsets = [0, 64], sizes = [4, 32], strides = [1, 1]} : vector<4x128xf32> to vector<4x32xf32>
    %394 = vector.extract_strided_slice %380 {offsets = [0, 96], sizes = [4, 32], strides = [1, 1]} : vector<4x128xf32> to vector<4x32xf32>
    %395 = arith.mulf %386, %394 : vector<4x32xf32>
    %396 = arith.addf %393, %395 : vector<4x32xf32>
    %397 = math.tanh %396 : vector<4x32xf32>
    %cst_68 = arith.constant 1.000000e+00 : f32
    %398 = vector.broadcast %cst_68 : f32 to vector<4x32xf32>
    %399 = arith.subf %398, %392 : vector<4x32xf32>
    %400 = arith.mulf %399, %397 : vector<4x32xf32>
    %401 = arith.mulf %392, %375 : vector<4x32xf32>
    %402 = arith.addf %400, %401 : vector<4x32xf32>
    %403 = arith.truncf %402 : vector<4x32xf32> to vector<4x32xbf16>
    %cst_69 = arith.constant dense<0.000000e+00> : vector<4x128xf32>
    %404 = tpu.matmul %403, %5, %cst_69 {dimension_numbers = #tpu.dot_dimension_numbers<[1], [0], [0], [1], [0, 0, 1, 1], [], []>} : vector<4x32xbf16>, vector<32x128xbf16>, vector<4x128xf32> -> vector<4x128xf32>
    %405 = vector.extract_strided_slice %281 {offsets = [0, 4, 0], sizes = [4, 1, 128], strides = [1, 1, 1]} : vector<4x8x128xf32> to vector<4x1x128xf32>
    %406 = vector.shape_cast %405 : vector<4x1x128xf32> to vector<4x128xf32>
    %407 = arith.addf %404, %406 : vector<4x128xf32>
    %408 = vector.extract_strided_slice %407 {offsets = [0, 0], sizes = [4, 32], strides = [1, 1]} : vector<4x128xf32> to vector<4x32xf32>
    %409 = arith.negf %408 : vector<4x32xf32>
    %410 = math.exp %409 : vector<4x32xf32>
    %cst_70 = arith.constant 1.000000e+00 : f32
    %411 = vector.broadcast %cst_70 : f32 to vector<4x32xf32>
    %412 = arith.addf %411, %410 : vector<4x32xf32>
    %413 = arith.divf %411, %412 : vector<4x32xf32>
    %414 = vector.extract_strided_slice %407 {offsets = [0, 32], sizes = [4, 32], strides = [1, 1]} : vector<4x128xf32> to vector<4x32xf32>
    %415 = arith.negf %414 : vector<4x32xf32>
    %416 = math.exp %415 : vector<4x32xf32>
    %cst_71 = arith.constant 1.000000e+00 : f32
    %417 = vector.broadcast %cst_71 : f32 to vector<4x32xf32>
    %418 = arith.addf %417, %416 : vector<4x32xf32>
    %419 = arith.divf %417, %418 : vector<4x32xf32>
    %420 = vector.extract_strided_slice %407 {offsets = [0, 64], sizes = [4, 32], strides = [1, 1]} : vector<4x128xf32> to vector<4x32xf32>
    %421 = vector.extract_strided_slice %407 {offsets = [0, 96], sizes = [4, 32], strides = [1, 1]} : vector<4x128xf32> to vector<4x32xf32>
    %422 = arith.mulf %413, %421 : vector<4x32xf32>
    %423 = arith.addf %420, %422 : vector<4x32xf32>
    %424 = math.tanh %423 : vector<4x32xf32>
    %cst_72 = arith.constant 1.000000e+00 : f32
    %425 = vector.broadcast %cst_72 : f32 to vector<4x32xf32>
    %426 = arith.subf %425, %419 : vector<4x32xf32>
    %427 = arith.mulf %426, %424 : vector<4x32xf32>
    %428 = arith.mulf %419, %402 : vector<4x32xf32>
    %429 = arith.addf %427, %428 : vector<4x32xf32>
    %430 = arith.truncf %429 : vector<4x32xf32> to vector<4x32xbf16>
    %cst_73 = arith.constant dense<0.000000e+00> : vector<4x128xf32>
    %431 = tpu.matmul %430, %5, %cst_73 {dimension_numbers = #tpu.dot_dimension_numbers<[1], [0], [0], [1], [0, 0, 1, 1], [], []>} : vector<4x32xbf16>, vector<32x128xbf16>, vector<4x128xf32> -> vector<4x128xf32>
    %432 = vector.extract_strided_slice %281 {offsets = [0, 5, 0], sizes = [4, 1, 128], strides = [1, 1, 1]} : vector<4x8x128xf32> to vector<4x1x128xf32>
    %433 = vector.shape_cast %432 : vector<4x1x128xf32> to vector<4x128xf32>
    %434 = arith.addf %431, %433 : vector<4x128xf32>
    %435 = vector.extract_strided_slice %434 {offsets = [0, 0], sizes = [4, 32], strides = [1, 1]} : vector<4x128xf32> to vector<4x32xf32>
    %436 = arith.negf %435 : vector<4x32xf32>
    %437 = math.exp %436 : vector<4x32xf32>
    %cst_74 = arith.constant 1.000000e+00 : f32
    %438 = vector.broadcast %cst_74 : f32 to vector<4x32xf32>
    %439 = arith.addf %438, %437 : vector<4x32xf32>
    %440 = arith.divf %438, %439 : vector<4x32xf32>
    %441 = vector.extract_strided_slice %434 {offsets = [0, 32], sizes = [4, 32], strides = [1, 1]} : vector<4x128xf32> to vector<4x32xf32>
    %442 = arith.negf %441 : vector<4x32xf32>
    %443 = math.exp %442 : vector<4x32xf32>
    %cst_75 = arith.constant 1.000000e+00 : f32
    %444 = vector.broadcast %cst_75 : f32 to vector<4x32xf32>
    %445 = arith.addf %444, %443 : vector<4x32xf32>
    %446 = arith.divf %444, %445 : vector<4x32xf32>
    %447 = vector.extract_strided_slice %434 {offsets = [0, 64], sizes = [4, 32], strides = [1, 1]} : vector<4x128xf32> to vector<4x32xf32>
    %448 = vector.extract_strided_slice %434 {offsets = [0, 96], sizes = [4, 32], strides = [1, 1]} : vector<4x128xf32> to vector<4x32xf32>
    %449 = arith.mulf %440, %448 : vector<4x32xf32>
    %450 = arith.addf %447, %449 : vector<4x32xf32>
    %451 = math.tanh %450 : vector<4x32xf32>
    %cst_76 = arith.constant 1.000000e+00 : f32
    %452 = vector.broadcast %cst_76 : f32 to vector<4x32xf32>
    %453 = arith.subf %452, %446 : vector<4x32xf32>
    %454 = arith.mulf %453, %451 : vector<4x32xf32>
    %455 = arith.mulf %446, %429 : vector<4x32xf32>
    %456 = arith.addf %454, %455 : vector<4x32xf32>
    %457 = arith.truncf %456 : vector<4x32xf32> to vector<4x32xbf16>
    %cst_77 = arith.constant dense<0.000000e+00> : vector<4x128xf32>
    %458 = tpu.matmul %457, %5, %cst_77 {dimension_numbers = #tpu.dot_dimension_numbers<[1], [0], [0], [1], [0, 0, 1, 1], [], []>} : vector<4x32xbf16>, vector<32x128xbf16>, vector<4x128xf32> -> vector<4x128xf32>
    %459 = vector.extract_strided_slice %281 {offsets = [0, 6, 0], sizes = [4, 1, 128], strides = [1, 1, 1]} : vector<4x8x128xf32> to vector<4x1x128xf32>
    %460 = vector.shape_cast %459 : vector<4x1x128xf32> to vector<4x128xf32>
    %461 = arith.addf %458, %460 : vector<4x128xf32>
    %462 = vector.extract_strided_slice %461 {offsets = [0, 0], sizes = [4, 32], strides = [1, 1]} : vector<4x128xf32> to vector<4x32xf32>
    %463 = arith.negf %462 : vector<4x32xf32>
    %464 = math.exp %463 : vector<4x32xf32>
    %cst_78 = arith.constant 1.000000e+00 : f32
    %465 = vector.broadcast %cst_78 : f32 to vector<4x32xf32>
    %466 = arith.addf %465, %464 : vector<4x32xf32>
    %467 = arith.divf %465, %466 : vector<4x32xf32>
    %468 = vector.extract_strided_slice %461 {offsets = [0, 32], sizes = [4, 32], strides = [1, 1]} : vector<4x128xf32> to vector<4x32xf32>
    %469 = arith.negf %468 : vector<4x32xf32>
    %470 = math.exp %469 : vector<4x32xf32>
    %cst_79 = arith.constant 1.000000e+00 : f32
    %471 = vector.broadcast %cst_79 : f32 to vector<4x32xf32>
    %472 = arith.addf %471, %470 : vector<4x32xf32>
    %473 = arith.divf %471, %472 : vector<4x32xf32>
    %474 = vector.extract_strided_slice %461 {offsets = [0, 64], sizes = [4, 32], strides = [1, 1]} : vector<4x128xf32> to vector<4x32xf32>
    %475 = vector.extract_strided_slice %461 {offsets = [0, 96], sizes = [4, 32], strides = [1, 1]} : vector<4x128xf32> to vector<4x32xf32>
    %476 = arith.mulf %467, %475 : vector<4x32xf32>
    %477 = arith.addf %474, %476 : vector<4x32xf32>
    %478 = math.tanh %477 : vector<4x32xf32>
    %cst_80 = arith.constant 1.000000e+00 : f32
    %479 = vector.broadcast %cst_80 : f32 to vector<4x32xf32>
    %480 = arith.subf %479, %473 : vector<4x32xf32>
    %481 = arith.mulf %480, %478 : vector<4x32xf32>
    %482 = arith.mulf %473, %456 : vector<4x32xf32>
    %483 = arith.addf %481, %482 : vector<4x32xf32>
    %484 = arith.truncf %483 : vector<4x32xf32> to vector<4x32xbf16>
    %cst_81 = arith.constant dense<0.000000e+00> : vector<4x128xf32>
    %485 = tpu.matmul %484, %5, %cst_81 {dimension_numbers = #tpu.dot_dimension_numbers<[1], [0], [0], [1], [0, 0, 1, 1], [], []>} : vector<4x32xbf16>, vector<32x128xbf16>, vector<4x128xf32> -> vector<4x128xf32>
    %486 = vector.extract_strided_slice %281 {offsets = [0, 7, 0], sizes = [4, 1, 128], strides = [1, 1, 1]} : vector<4x8x128xf32> to vector<4x1x128xf32>
    %487 = vector.shape_cast %486 : vector<4x1x128xf32> to vector<4x128xf32>
    %488 = arith.addf %485, %487 : vector<4x128xf32>
    %489 = vector.extract_strided_slice %488 {offsets = [0, 0], sizes = [4, 32], strides = [1, 1]} : vector<4x128xf32> to vector<4x32xf32>
    %490 = arith.negf %489 : vector<4x32xf32>
    %491 = math.exp %490 : vector<4x32xf32>
    %cst_82 = arith.constant 1.000000e+00 : f32
    %492 = vector.broadcast %cst_82 : f32 to vector<4x32xf32>
    %493 = arith.addf %492, %491 : vector<4x32xf32>
    %494 = arith.divf %492, %493 : vector<4x32xf32>
    %495 = vector.extract_strided_slice %488 {offsets = [0, 32], sizes = [4, 32], strides = [1, 1]} : vector<4x128xf32> to vector<4x32xf32>
    %496 = arith.negf %495 : vector<4x32xf32>
    %497 = math.exp %496 : vector<4x32xf32>
    %cst_83 = arith.constant 1.000000e+00 : f32
    %498 = vector.broadcast %cst_83 : f32 to vector<4x32xf32>
    %499 = arith.addf %498, %497 : vector<4x32xf32>
    %500 = arith.divf %498, %499 : vector<4x32xf32>
    %501 = vector.extract_strided_slice %488 {offsets = [0, 64], sizes = [4, 32], strides = [1, 1]} : vector<4x128xf32> to vector<4x32xf32>
    %502 = vector.extract_strided_slice %488 {offsets = [0, 96], sizes = [4, 32], strides = [1, 1]} : vector<4x128xf32> to vector<4x32xf32>
    %503 = arith.mulf %494, %502 : vector<4x32xf32>
    %504 = arith.addf %501, %503 : vector<4x32xf32>
    %505 = math.tanh %504 : vector<4x32xf32>
    %cst_84 = arith.constant 1.000000e+00 : f32
    %506 = vector.broadcast %cst_84 : f32 to vector<4x32xf32>
    %507 = arith.subf %506, %500 : vector<4x32xf32>
    %508 = arith.mulf %507, %505 : vector<4x32xf32>
    %509 = arith.mulf %500, %483 : vector<4x32xf32>
    %510 = arith.addf %508, %509 : vector<4x32xf32>
    %511 = vector.shape_cast %321 : vector<4x32xf32> to vector<4x1x32xf32>
    %512 = vector.shape_cast %348 : vector<4x32xf32> to vector<4x1x32xf32>
    %513 = vector.shape_cast %375 : vector<4x32xf32> to vector<4x1x32xf32>
    %514 = vector.shape_cast %402 : vector<4x32xf32> to vector<4x1x32xf32>
    %515 = vector.shape_cast %429 : vector<4x32xf32> to vector<4x1x32xf32>
    %516 = vector.shape_cast %456 : vector<4x32xf32> to vector<4x1x32xf32>
    %517 = vector.shape_cast %483 : vector<4x32xf32> to vector<4x1x32xf32>
    %518 = vector.shape_cast %510 : vector<4x32xf32> to vector<4x1x32xf32>
    %519 = tpu.concatenate %511, %512, %513, %514, %515, %516, %517, %518 in 1 : vector<4x1x32xf32>, vector<4x1x32xf32>, vector<4x1x32xf32>, vector<4x1x32xf32>, vector<4x1x32xf32>, vector<4x1x32xf32>, vector<4x1x32xf32>, vector<4x1x32xf32> -> vector<4x8x32xf32>
    %520 = vector.shape_cast %10 : vector<1x32xf32> to vector<1x1x32xf32>
    %521 = vector.broadcast %520 : vector<1x1x32xf32> to vector<4x8x32xf32>
    %522 = arith.mulf %519, %521 : vector<4x8x32xf32>
    %cst_85 = arith.constant dense<0.000000e+00> : vector<4x8xf32>
    %523 = vector.multi_reduction <add>, %522, %cst_85 [2] : vector<4x8x32xf32> to vector<4x8xf32>
    %524 = vector.shape_cast %523 : vector<4x8xf32> to vector<4x8x1xf32>
    %525 = vector.shape_cast %12 : vector<1x1xf32> to vector<1x1x1xf32>
    %526 = vector.broadcast %525 : vector<1x1x1xf32> to vector<4x8x1xf32>
    %527 = arith.addf %524, %526 : vector<4x8x1xf32>
    %c0_86 = arith.constant 0 : index
    %c0_87 = arith.constant 0 : index
    %c0_88 = arith.constant 0 : index
    %528 = vector.load %arg5[%c0_86, %c0_87, %c0_88] : memref<4x8x1xf32, #tpu.memory_space<vmem>>, vector<4x8x1xf32>
    tpu.vector_store %arg5[%c0_86, %c0_87, %c0_88], %527 {strides = array<i32>} : memref<4x8x1xf32, #tpu.memory_space<vmem>>, vector<4x8x1xf32>,
    return
  }
}

</mosaic_0001>

<llo_original>
// kernel: cgf_en_de_forward.1
$region0: #{cgf_en_de_forward.1}
  #allocation0 [shape = 'u32[]', space=smem, size = 0x4, offset = 0x4, fixed_abs, tag = 'smem constant byte address 0x4 - core index']
  #allocation1 [shape = 'u32[72,128]{1,0:T(1,128)}', space=vmem, size = 0x9000, scoped, tag = 'internal scratch']
  %s0 = inlined_call_operand.vmem [shape: f32[4,8,1], index: 0, kind: input, shape index: {}]
  %s1 = inlined_call_operand.vmem [shape: f32[32,12], index: 1, kind: input, shape index: {}]
  %s2 = inlined_call_operand.vmem [shape: bf16[2,32,128], index: 2, kind: input, shape index: {}]
  %s3 = inlined_call_operand.vmem [shape: f32[12,128], index: 3, kind: input, shape index: {}]
  %s4 = inlined_call_operand.vmem [shape: f32[8,128], index: 4, kind: input, shape index: {}]
  %s5 = inlined_call_operand.vmem [shape: f32[4,8,1], index: 5, kind: output, shape index: {}]
  %s6 = sld [smem:[#allocation0]]
  $region30: #{cgf_en_de_forward.1} parent=0
    _
  %s8 = ssub.s32 1, %s6
  %s9 = scalar_select 0, %s8, %s6
  // Predicated region
  $region2: #{cgf_en_de_forward.1} parent=0 // pred_check
    _
  $region3: #{cgf_en_de_forward.1} parent=0 // pred_check_branch
    %11 = sbr.rel (0) target = $region5
  $region4: #{cgf_en_de_forward.1} parent=0 // pred_region
    _
  $region5: #{cgf_en_de_forward.1} parent=0 // pred_fallthru
    _
  // Predicated region
  $region6: #{cgf_en_de_forward.1} parent=0 // pred_check
    _
  $region7: #{cgf_en_de_forward.1} parent=0 // pred_check_branch
    %13 = sbr.rel (0) target = $region9
  $region8: #{cgf_en_de_forward.1} parent=0 // pred_region
    _
  $region9: #{cgf_en_de_forward.1} parent=0 // pred_fallthru
    _
  // Predicated region
  $region10: #{cgf_en_de_forward.1} parent=0 // pred_check
    _
  $region11: #{cgf_en_de_forward.1} parent=0 // pred_check_branch
    %15 = sbr.rel (0) target = $region13
  $region12: #{cgf_en_de_forward.1} parent=0 // pred_region
    _
  $region13: #{cgf_en_de_forward.1} parent=0 // pred_fallthru
    _
  // Predicated region
  $region14: #{cgf_en_de_forward.1} parent=0 // pred_check
    _
  $region15: #{cgf_en_de_forward.1} parent=0 // pred_check_branch
    %17 = sbr.rel (0) target = $region17
  $region16: #{cgf_en_de_forward.1} parent=0 // pred_region
    _
  $region17: #{cgf_en_de_forward.1} parent=0 // pred_fallthru
    _
  // Predicated region
  $region18: #{cgf_en_de_forward.1} parent=0 // pred_check
    _
  $region19: #{cgf_en_de_forward.1} parent=0 // pred_check_branch
    %19 = sbr.rel (0) target = $region21
  $region20: #{cgf_en_de_forward.1} parent=0 // pred_region
    _
  $region21: #{cgf_en_de_forward.1} parent=0 // pred_fallthru
    _
  %v21 = vld [vmem:[%s0] sm:$0xff]
  %v22 = vld [vmem:[%s0 + $0x8] sm:$0xff]
  %v23 = vld [vmem:[%s0 + $0x10] sm:$0xff]
  %v24 = vld [vmem:[%s0 + $0x18] sm:$0xff]
  %v25 = vld [vmem:[%s2] sm:$0xf]
  %v26 = vld [vmem:[%s2 + $0x4] sm:$0xf]
  %v27 = vld [vmem:[%s2 + $0x8] sm:$0xf]
  %v28 = vld [vmem:[%s2 + $0xc] sm:$0xf]
  %s29 = scalar_lea.vmem %s2, 16
  %v30 = vld [vmem:[%s29] sm:$0xf]
  %v31 = vld [vmem:[%s29 + $0x4] sm:$0xf]
  %v32 = vld [vmem:[%s29 + $0x8] sm:$0xf]
  %v33 = vld [vmem:[%s29 + $0xc] sm:$0xf]
  %v34 = vld [vmem:[%s4] sm:$0x1]
  %v35 = vld [vmem:[%s4 + $0x1] sm:$0x1]
  %v36 = vld [vmem:[%s4 + $0x2] sm:$0x1]
  %v37 = vld [vmem:[%s4 + $0x3] sm:$0x1]
  %v38 = vld [vmem:[%s4 + $0x4] sm:$0x1]
  %v39 = vld [vmem:[%s4 + $0x5] sm:$0x1]
  %v40 = vld [vmem:[%s4 + $0x6] sm:$0x1]
  %42 = vset.pattern.permute.xlu0 0
  %43 = vperm.xlu0 %42, %v21
  %v44 = vpop.permute.xlu0 %43
  %47 = vset.pattern.permute.xlu0 0
  %48 = vperm.xlu0 %47, %v22
  %v49 = vpop.permute.xlu0 %48
  %52 = vset.pattern.permute.xlu0 0
  %53 = vperm.xlu0 %52, %v23
  %v54 = vpop.permute.xlu0 %53
  %57 = vset.pattern.permute.xlu0 0
  %58 = vperm.xlu0 %57, %v24
  %v59 = vpop.permute.xlu0 %58
  %v61 = vperm.slane %v34, 0
  %v62 = vmul.f32 %v44, %v61
  %v63 = vmul.f32 %v49, %v61
  %v64 = vmul.f32 %v54, %v61
  %v65 = vmul.f32 %v59, %v61
  %v66 = vperm.slane %v35, 0
  %v67 = vadd.f32 %v62, %v66
  %v68 = vadd.f32 %v63, %v66
  %v69 = vadd.f32 %v64, %v66
  %v70 = vadd.f32 %v65, %v66
  %v71 = vperm.slane %v36, 0
  %v72 = vadd.f32 %v67, %v71
  %v73 = vadd.f32 %v68, %v71
  %v74 = vadd.f32 %v69, %v71
  %v75 = vadd.f32 %v70, %v71
  %v76 = vxor.u32 %v72, 2147483648
  %v77 = vxor.u32 %v73, 2147483648
  %v78 = vxor.u32 %v74, 2147483648
  %v79 = vxor.u32 %v75, 2147483648
  %v80 = vmul.f32 %v76, 1.442695
  %v81 = vpow.pop %v80
  %v82 = vmul.f32 %v77, 1.442695
  %v83 = vpow.pop %v82
  %v84 = vmul.f32 %v78, 1.442695
  %v85 = vpow.pop %v84
  %v86 = vmul.f32 %v79, 1.442695
  %v87 = vpow.pop %v86
  %v88 = vadd.f32 %v81, 1.0
  %v89 = vadd.f32 %v83, 1.0
  %v90 = vadd.f32 %v85, 1.0
  %v91 = vadd.f32 %v87, 1.0
  %v92 = vrcp.pop %v88
  %v93 = vmul.f32 %v88, %v92
  %v94 = vsub.f32 1.0, %v93
  %v95 = vmul.f32 %v92, %v94
  %v96 = vadd.f32 %v92, %v95
  %vm97 = vweird.f32 %v88
  %vm98 = vweird.f32 %v92
  %vm99 = vmor %vm97, %vm98
  %v100 = vsel %vm99, %v92, %v96
  %v101 = vand.u32 2147483647, %v88
  %vm102 = vcmp.eq.f32.partialorder %v101, 8.507059e+37
  %v103 = vand.u32 %v88, 2147483648
  %v104 = vor.u32 1.1754944e-38, %v103
  %v105 = vsel %vm102, %v104, %v100
  %v106 = vmul.f32 1.0, %v105
  %v107 = vrcp.pop %v89
  %v108 = vmul.f32 %v89, %v107
  %v109 = vsub.f32 1.0, %v108
  %v110 = vmul.f32 %v107, %v109
  %v111 = vadd.f32 %v107, %v110
  %vm112 = vweird.f32 %v89
  %vm113 = vweird.f32 %v107
  %vm114 = vmor %vm112, %vm113
  %v115 = vsel %vm114, %v107, %v111
  %v116 = vand.u32 2147483647, %v89
  %vm117 = vcmp.eq.f32.partialorder %v116, 8.507059e+37
  %v118 = vand.u32 %v89, 2147483648
  %v119 = vor.u32 1.1754944e-38, %v118
  %v120 = vsel %vm117, %v119, %v115
  %v121 = vmul.f32 1.0, %v120
  %v122 = vrcp.pop %v90
  %v123 = vmul.f32 %v90, %v122
  %v124 = vsub.f32 1.0, %v123
  %v125 = vmul.f32 %v122, %v124
  %v126 = vadd.f32 %v122, %v125
  %vm127 = vweird.f32 %v90
  %vm128 = vweird.f32 %v122
  %vm129 = vmor %vm127, %vm128
  %v130 = vsel %vm129, %v122, %v126
  %v131 = vand.u32 2147483647, %v90
  %vm132 = vcmp.eq.f32.partialorder %v131, 8.507059e+37
  %v133 = vand.u32 %v90, 2147483648
  %v134 = vor.u32 1.1754944e-38, %v133
  %v135 = vsel %vm132, %v134, %v130
  %v136 = vmul.f32 1.0, %v135
  %v137 = vrcp.pop %v91
  %v138 = vmul.f32 %v91, %v137
  %v139 = vsub.f32 1.0, %v138
  %v140 = vmul.f32 %v137, %v139
  %v141 = vadd.f32 %v137, %v140
  %vm142 = vweird.f32 %v91
  %vm143 = vweird.f32 %v137
  %vm144 = vmor %vm142, %vm143
  %v145 = vsel %vm144, %v137, %v141
  %v146 = vand.u32 2147483647, %v91
  %vm147 = vcmp.eq.f32.partialorder %v146, 8.507059e+37
  %v148 = vand.u32 %v91, 2147483648
  %v149 = vor.u32 1.1754944e-38, %v148
  %v150 = vsel %vm147, %v149, %v145
  %v151 = vmul.f32 1.0, %v150
  %153 = vrot.lane.b32.xlu0 %v71, 64
  %v154 = vpop.permute.xlu0 %153
  %v156 = vmul.f32 %v106, %v154
  %v157 = vmul.f32 %v121, %v154
  %v158 = vmul.f32 %v136, %v154
  %v159 = vmul.f32 %v151, %v154
  %164 = vrot.lane.b32.xlu0 %v156, 64
  %v165 = vpop.permute.xlu0 %164
  %166 = vrot.lane.b32.xlu0 %v157, 64
  %v167 = vpop.permute.xlu0 %166
  %168 = vrot.lane.b32.xlu0 %v158, 64
  %v169 = vpop.permute.xlu0 %168
  %170 = vrot.lane.b32.xlu0 %v159, 64
  %v171 = vpop.permute.xlu0 %170
  %v176 = vadd.f32 %v67, %v165
  %v177 = vadd.f32 %v68, %v167
  %v178 = vadd.f32 %v69, %v169
  %v179 = vadd.f32 %v70, %v171
  %v180 = vtanh.pop %v176
  %v181 = vtanh.pop %v177
  %v182 = vtanh.pop %v178
  %v183 = vtanh.pop %v179
  %v184 = vsub.f32 1.0, %v106
  %v185 = vsub.f32 1.0, %v121
  %v186 = vsub.f32 1.0, %v136
  %v187 = vsub.f32 1.0, %v151
  %192 = vrot.lane.b32.xlu0 %v180, 96
  %v193 = vpop.permute.xlu0 %192
  %194 = vrot.lane.b32.xlu0 %v181, 96
  %v195 = vpop.permute.xlu0 %194
  %196 = vrot.lane.b32.xlu0 %v182, 96
  %v197 = vpop.permute.xlu0 %196
  %198 = vrot.lane.b32.xlu0 %v183, 96
  %v199 = vpop.permute.xlu0 %198
  %v204 = vmul.f32 %v184, %v193
  %v205 = vmul.f32 %v185, %v195
  %v206 = vmul.f32 %v186, %v197
  %v207 = vmul.f32 %v187, %v199
  %v208 = vmul.f32 %v106, 0.0
  %v209 = vmul.f32 %v121, 0.0
  %v210 = vmul.f32 %v136, 0.0
  %v211 = vmul.f32 %v151, 0.0
  %v212 = vadd.f32 %v204, %v208
  %v213 = vadd.f32 %v205, %v209
  %v214 = vadd.f32 %v206, %v210
  %v215 = vadd.f32 %v207, %v211
  %v216 = vpack.c.bf16 %v212, %v212
  %v217 = vpack.c.bf16 %v213, %v213
  %v218 = vpack.c.bf16 %v214, %v214
  %v219 = vpack.c.bf16 %v215, %v215
  %v224 = vunpack.c.l.b16 %v216
  %v225 = vunpack.c.l.b16 %v217
  %v226 = vunpack.c.l.b16 %v218
  %v227 = vunpack.c.l.b16 %v219
  %v228 = vrot.slane %v225, 7
  %vm229 = vcmask 1041409
  %v230 = vsel %vm229, %v228, %v224
  %v231 = vrot.slane %v226, 6
  %vm232 = vcmask 1042434
  %v233 = vsel %vm232, %v231, %v230
  %v234 = vrot.slane %v227, 5
  %vm235 = vcmask 1043459
  %v236 = vsel %vm235, %v234, %v233
  %v237 = vpack.c.b16 %v236, %v236
  %238 = vrot.lane.b32.xlu0 %v237, 96
  %v239 = vpop.permute.xlu0 %238
  %v244 = vunpack.c.l.b16 %v25
  %v245 = vunpack.c.l.b16 %v26
  %v246 = vunpack.c.l.b16 %v27
  %v247 = vunpack.c.l.b16 %v28
  %v248 = vpack.c.b16 %v245, %v244
  %v249 = vpack.c.b16 %v247, %v246
  %vm252 = vcmask 261120
  %v254 = vsel %vm252, %v239, 0
  %256 = vmatpush.bf16.msra.mxu0 0
  %257 = vmatpush.bf16.msra.mxu0 0
  %258 = vmatpush.bf16.msra.mxu0 0
  %259 = vmatpush.bf16.msra.mxu0 0
  %260 = vmatpush.bf16.msra.mxu0 0
  %261 = vmatpush.bf16.msra.mxu0 0
  %262 = vmatpush.bf16.msra.mxu0 %v249
  %263 = vmatpush.bf16.msra.mxu0 %v248
  %264 = vmatmul.bf16.gmra.mxu0 %v254
  %v265 = vpop.f32.mrf.mxu0
  %v266 = vadd.f32 %v71, %v265
  %v267 = vpop.f32.mrf.mxu0
  %268 = vdwg.mxu0
  %v270 = vrot.slane %v266, 7
  %v271 = vrot.slane %v266, 1
  %v272 = vrot.slane %v266, 2
  %v277 = vadd.f32 %v67, %v270
  %v278 = vadd.f32 %v68, %v266
  %v279 = vadd.f32 %v69, %v271
  %v280 = vadd.f32 %v70, %v272
  %v281 = vxor.u32 %v277, 2147483648
  %v282 = vxor.u32 %v278, 2147483648
  %v283 = vxor.u32 %v279, 2147483648
  %v284 = vxor.u32 %v280, 2147483648
  %v285 = vmul.f32 %v281, 1.442695
  %v286 = vpow.pop %v285
  %v287 = vmul.f32 %v282, 1.442695
  %v288 = vpow.pop %v287
  %v289 = vmul.f32 %v283, 1.442695
  %v290 = vpow.pop %v289
  %v291 = vmul.f32 %v284, 1.442695
  %v292 = vpow.pop %v291
  %v293 = vadd.f32 %v286, 1.0
  %v294 = vadd.f32 %v288, 1.0
  %v295 = vadd.f32 %v290, 1.0
  %v296 = vadd.f32 %v292, 1.0
  %v297 = vrcp.pop %v293
  %v298 = vmul.f32 %v293, %v297
  %v299 = vsub.f32 1.0, %v298
  %v300 = vmul.f32 %v297, %v299
  %v301 = vadd.f32 %v297, %v300
  %vm302 = vweird.f32 %v293
  %vm303 = vweird.f32 %v297
  %vm304 = vmor %vm302, %vm303
  %v305 = vsel %vm304, %v297, %v301
  %v306 = vand.u32 2147483647, %v293
  %vm307 = vcmp.eq.f32.partialorder %v306, 8.507059e+37
  %v308 = vand.u32 %v293, 2147483648
  %v309 = vor.u32 1.1754944e-38, %v308
  %v310 = vsel %vm307, %v309, %v305
  %v311 = vmul.f32 1.0, %v310
  %v312 = vrcp.pop %v294
  %v313 = vmul.f32 %v294, %v312
  %v314 = vsub.f32 1.0, %v313
  %v315 = vmul.f32 %v312, %v314
  %v316 = vadd.f32 %v312, %v315
  %vm317 = vweird.f32 %v294
  %vm318 = vweird.f32 %v312
  %vm319 = vmor %vm317, %vm318
  %v320 = vsel %vm319, %v312, %v316
  %v321 = vand.u32 2147483647, %v294
  %vm322 = vcmp.eq.f32.partialorder %v321, 8.507059e+37
  %v323 = vand.u32 %v294, 2147483648
  %v324 = vor.u32 1.1754944e-38, %v323
  %v325 = vsel %vm322, %v324, %v320
  %v326 = vmul.f32 1.0, %v325
  %v327 = vrcp.pop %v295
  %v328 = vmul.f32 %v295, %v327
  %v329 = vsub.f32 1.0, %v328
  %v330 = vmul.f32 %v327, %v329
  %v331 = vadd.f32 %v327, %v330
  %vm332 = vweird.f32 %v295
  %vm333 = vweird.f32 %v327
  %vm334 = vmor %vm332, %vm333
  %v335 = vsel %vm334, %v327, %v331
  %v336 = vand.u32 2147483647, %v295
  %vm337 = vcmp.eq.f32.partialorder %v336, 8.507059e+37
  %v338 = vand.u32 %v295, 2147483648
  %v339 = vor.u32 1.1754944e-38, %v338
  %v340 = vsel %vm337, %v339, %v335
  %v341 = vmul.f32 1.0, %v340
  %v342 = vrcp.pop %v296
  %v343 = vmul.f32 %v296, %v342
  %v344 = vsub.f32 1.0, %v343
  %v345 = vmul.f32 %v342, %v344
  %v346 = vadd.f32 %v342, %v345
  %vm347 = vweird.f32 %v296
  %vm348 = vweird.f32 %v342
  %vm349 = vmor %vm347, %vm348
  %v350 = vsel %vm349, %v342, %v346
  %v351 = vand.u32 2147483647, %v296
  %vm352 = vcmp.eq.f32.partialorder %v351, 8.507059e+37
  %v353 = vand.u32 %v296, 2147483648
  %v354 = vor.u32 1.1754944e-38, %v353
  %v355 = vsel %vm352, %v354, %v350
  %v356 = vmul.f32 1.0, %v355
  %357 = vrot.lane.b32.xlu0 %v270, 64
  %v358 = vpop.permute.xlu0 %357
  %359 = vrot.lane.b32.xlu0 %v266, 64
  %v360 = vpop.permute.xlu0 %359
  %361 = vrot.lane.b32.xlu0 %v271, 64
  %v362 = vpop.permute.xlu0 %361
  %363 = vrot.lane.b32.xlu0 %v272, 64
  %v364 = vpop.permute.xlu0 %363
  %v369 = vmul.f32 %v311, %v358
  %v370 = vmul.f32 %v326, %v360
  %v371 = vmul.f32 %v341, %v362
  %v372 = vmul.f32 %v356, %v364
  %377 = vrot.lane.b32.xlu0 %v369, 64
  %v378 = vpop.permute.xlu0 %377
  %379 = vrot.lane.b32.xlu0 %v370, 64
  %v380 = vpop.permute.xlu0 %379
  %381 = vrot.lane.b32.xlu0 %v371, 64
  %v382 = vpop.permute.xlu0 %381
  %383 = vrot.lane.b32.xlu0 %v372, 64
  %v384 = vpop.permute.xlu0 %383
  %v389 = vadd.f32 %v67, %v378
  %v390 = vadd.f32 %v68, %v380
  %v391 = vadd.f32 %v69, %v382
  %v392 = vadd.f32 %v70, %v384
  %v393 = vtanh.pop %v389
  %v394 = vtanh.pop %v390
  %v395 = vtanh.pop %v391
  %v396 = vtanh.pop %v392
  %v397 = vsub.f32 1.0, %v311
  %v398 = vsub.f32 1.0, %v326
  %v399 = vsub.f32 1.0, %v341
  %v400 = vsub.f32 1.0, %v356
  %405 = vrot.lane.b32.xlu0 %v393, 96
  %v406 = vpop.permute.xlu0 %405
  %407 = vrot.lane.b32.xlu0 %v394, 96
  %v408 = vpop.permute.xlu0 %407
  %409 = vrot.lane.b32.xlu0 %v395, 96
  %v410 = vpop.permute.xlu0 %409
  %411 = vrot.lane.b32.xlu0 %v396, 96
  %v412 = vpop.permute.xlu0 %411
  %v417 = vmul.f32 %v397, %v406
  %v418 = vmul.f32 %v398, %v408
  %v419 = vmul.f32 %v399, %v410
  %v420 = vmul.f32 %v400, %v412
  %v425 = vrot.slane %v212, 7
  %v426 = vrot.slane %v213, 7
  %v427 = vrot.slane %v214, 7
  %v428 = vrot.slane %v215, 7
  %v433 = vmul.f32 %v311, %v425
  %v434 = vmul.f32 %v326, %v426
  %v435 = vmul.f32 %v341, %v427
  %v436 = vmul.f32 %v356, %v428
  %v437 = vadd.f32 %v417, %v433
  %v438 = vadd.f32 %v418, %v434
  %v439 = vadd.f32 %v419, %v435
  %v440 = vadd.f32 %v420, %v436
  %v441 = vpack.c.bf16 %v437, %v437
  %v442 = vpack.c.bf16 %v438, %v438
  %v443 = vpack.c.bf16 %v439, %v439
  %v444 = vpack.c.bf16 %v440, %v440
  %v449 = vunpack.c.l.b16 %v441
  %v450 = vunpack.c.l.b16 %v442
  %v451 = vunpack.c.l.b16 %v443
  %v452 = vunpack.c.l.b16 %v444
  %v453 = vrot.slane %v449, 1
  %v454 = vsel %vm229, %v450, %v453
  %v455 = vrot.slane %v451, 7
  %v456 = vsel %vm232, %v455, %v454
  %v457 = vrot.slane %v452, 6
  %v458 = vsel %vm235, %v457, %v456
  %v459 = vpack.c.b16 %v458, %v458
  %460 = vrot.lane.b32.xlu0 %v459, 96
  %v461 = vpop.permute.xlu0 %460
  %v463 = vsel %vm252, %v461, 0
  %465 = vmatpush.bf16.msra.mxu0 0
  %466 = vmatpush.bf16.msra.mxu0 0
  %467 = vmatpush.bf16.msra.mxu0 0
  %468 = vmatpush.bf16.msra.mxu0 0
  %469 = vmatpush.bf16.msra.mxu0 0
  %470 = vmatpush.bf16.msra.mxu0 0
  %471 = vmatpush.bf16.msra.mxu0 %v249
  %472 = vmatpush.bf16.msra.mxu0 %v248
  %473 = vmatmul.bf16.gmra.mxu0 %v463
  %v474 = vpop.f32.mrf.mxu0
  %v475 = vadd.f32 %v71, %v474
  %v476 = vpop.f32.mrf.mxu0
  %477 = vdwg.mxu0
  %v479 = vrot.slane %v475, 6
  %v480 = vrot.slane %v475, 7
  %v481 = vrot.slane %v475, 1
  %v486 = vadd.f32 %v67, %v479
  %v487 = vadd.f32 %v68, %v480
  %v488 = vadd.f32 %v69, %v475
  %v489 = vadd.f32 %v70, %v481
  %v490 = vxor.u32 %v486, 2147483648
  %v491 = vxor.u32 %v487, 2147483648
  %v492 = vxor.u32 %v488, 2147483648
  %v493 = vxor.u32 %v489, 2147483648
  %v494 = vmul.f32 %v490, 1.442695
  %v495 = vpow.pop %v494
  %v496 = vmul.f32 %v491, 1.442695
  %v497 = vpow.pop %v496
  %v498 = vmul.f32 %v492, 1.442695
  %v499 = vpow.pop %v498
  %v500 = vmul.f32 %v493, 1.442695
  %v501 = vpow.pop %v500
  %v502 = vadd.f32 %v495, 1.0
  %v503 = vadd.f32 %v497, 1.0
  %v504 = vadd.f32 %v499, 1.0
  %v505 = vadd.f32 %v501, 1.0
  %v506 = vrcp.pop %v502
  %v507 = vmul.f32 %v502, %v506
  %v508 = vsub.f32 1.0, %v507
  %v509 = vmul.f32 %v506, %v508
  %v510 = vadd.f32 %v506, %v509
  %vm511 = vweird.f32 %v502
  %vm512 = vweird.f32 %v506
  %vm513 = vmor %vm511, %vm512
  %v514 = vsel %vm513, %v506, %v510
  %v515 = vand.u32 2147483647, %v502
  %vm516 = vcmp.eq.f32.partialorder %v515, 8.507059e+37
  %v517 = vand.u32 %v502, 2147483648
  %v518 = vor.u32 1.1754944e-38, %v517
  %v519 = vsel %vm516, %v518, %v514
  %v520 = vmul.f32 1.0, %v519
  %v521 = vrcp.pop %v503
  %v522 = vmul.f32 %v503, %v521
  %v523 = vsub.f32 1.0, %v522
  %v524 = vmul.f32 %v521, %v523
  %v525 = vadd.f32 %v521, %v524
  %vm526 = vweird.f32 %v503
  %vm527 = vweird.f32 %v521
  %vm528 = vmor %vm526, %vm527
  %v529 = vsel %vm528, %v521, %v525
  %v530 = vand.u32 2147483647, %v503
  %vm531 = vcmp.eq.f32.partialorder %v530, 8.507059e+37
  %v532 = vand.u32 %v503, 2147483648
  %v533 = vor.u32 1.1754944e-38, %v532
  %v534 = vsel %vm531, %v533, %v529
  %v535 = vmul.f32 1.0, %v534
  %v536 = vrcp.pop %v504
  %v537 = vmul.f32 %v504, %v536
  %v538 = vsub.f32 1.0, %v537
  %v539 = vmul.f32 %v536, %v538
  %v540 = vadd.f32 %v536, %v539
  %vm541 = vweird.f32 %v504
  %vm542 = vweird.f32 %v536
  %vm543 = vmor %vm541, %vm542
  %v544 = vsel %vm543, %v536, %v540
  %v545 = vand.u32 2147483647, %v504
  %vm546 = vcmp.eq.f32.partialorder %v545, 8.507059e+37
  %v547 = vand.u32 %v504, 2147483648
  %v548 = vor.u32 1.1754944e-38, %v547
  %v549 = vsel %vm546, %v548, %v544
  %v550 = vmul.f32 1.0, %v549
  %v551 = vrcp.pop %v505
  %v552 = vmul.f32 %v505, %v551
  %v553 = vsub.f32 1.0, %v552
  %v554 = vmul.f32 %v551, %v553
  %v555 = vadd.f32 %v551, %v554
  %vm556 = vweird.f32 %v505
  %vm557 = vweird.f32 %v551
  %vm558 = vmor %vm556, %vm557
  %v559 = vsel %vm558, %v551, %v555
  %v560 = vand.u32 2147483647, %v505
  %vm561 = vcmp.eq.f32.partialorder %v560, 8.507059e+37
  %v562 = vand.u32 %v505, 2147483648
  %v563 = vor.u32 1.1754944e-38, %v562
  %v564 = vsel %vm561, %v563, %v559
  %v565 = vmul.f32 1.0, %v564
  %566 = vrot.lane.b32.xlu0 %v479, 64
  %v567 = vpop.permute.xlu0 %566
  %568 = vrot.lane.b32.xlu0 %v480, 64
  %v569 = vpop.permute.xlu0 %568
  %570 = vrot.lane.b32.xlu0 %v475, 64
  %v571 = vpop.permute.xlu0 %570
  %572 = vrot.lane.b32.xlu0 %v481, 64
  %v573 = vpop.permute.xlu0 %572
  %v578 = vmul.f32 %v520, %v567
  %v579 = vmul.f32 %v535, %v569
  %v580 = vmul.f32 %v550, %v571
  %v581 = vmul.f32 %v565, %v573
  %586 = vrot.lane.b32.xlu0 %v578, 64
  %v587 = vpop.permute.xlu0 %586
  %588 = vrot.lane.b32.xlu0 %v579, 64
  %v589 = vpop.permute.xlu0 %588
  %590 = vrot.lane.b32.xlu0 %v580, 64
  %v591 = vpop.permute.xlu0 %590
  %592 = vrot.lane.b32.xlu0 %v581, 64
  %v593 = vpop.permute.xlu0 %592
  %v598 = vadd.f32 %v67, %v587
  %v599 = vadd.f32 %v68, %v589
  %v600 = vadd.f32 %v69, %v591
  %v601 = vadd.f32 %v70, %v593
  %v602 = vtanh.pop %v598
  %v603 = vtanh.pop %v599
  %v604 = vtanh.pop %v600
  %v605 = vtanh.pop %v601
  %v606 = vsub.f32 1.0, %v520
  %v607 = vsub.f32 1.0, %v535
  %v608 = vsub.f32 1.0, %v550
  %v609 = vsub.f32 1.0, %v565
  %614 = vrot.lane.b32.xlu0 %v602, 96
  %v615 = vpop.permute.xlu0 %614
  %616 = vrot.lane.b32.xlu0 %v603, 96
  %v617 = vpop.permute.xlu0 %616
  %618 = vrot.lane.b32.xlu0 %v604, 96
  %v619 = vpop.permute.xlu0 %618
  %620 = vrot.lane.b32.xlu0 %v605, 96
  %v621 = vpop.permute.xlu0 %620
  %v626 = vmul.f32 %v606, %v615
  %v627 = vmul.f32 %v607, %v617
  %v628 = vmul.f32 %v608, %v619
  %v629 = vmul.f32 %v609, %v621
  %v634 = vrot.slane %v437, 7
  %v635 = vrot.slane %v438, 7
  %v636 = vrot.slane %v439, 7
  %v637 = vrot.slane %v440, 7
  %v642 = vmul.f32 %v520, %v634
  %v643 = vmul.f32 %v535, %v635
  %v644 = vmul.f32 %v550, %v636
  %v645 = vmul.f32 %v565, %v637
  %v646 = vadd.f32 %v626, %v642
  %v647 = vadd.f32 %v627, %v643
  %v648 = vadd.f32 %v628, %v644
  %v649 = vadd.f32 %v629, %v645
  %v650 = vpack.c.bf16 %v646, %v646
  %v651 = vpack.c.bf16 %v647, %v647
  %v652 = vpack.c.bf16 %v648, %v648
  %v653 = vpack.c.bf16 %v649, %v649
  %v658 = vunpack.c.l.b16 %v650
  %v659 = vunpack.c.l.b16 %v651
  %v660 = vunpack.c.l.b16 %v652
  %v661 = vunpack.c.l.b16 %v653
  %v662 = vrot.slane %v658, 2
  %v663 = vrot.slane %v659, 1
  %v664 = vsel %vm229, %v663, %v662
  %v665 = vsel %vm232, %v660, %v664
  %v666 = vrot.slane %v661, 7
  %v667 = vsel %vm235, %v666, %v665
  %v668 = vpack.c.b16 %v667, %v667
  %669 = vrot.lane.b32.xlu0 %v668, 96
  %v670 = vpop.permute.xlu0 %669
  %v672 = vsel %vm252, %v670, 0
  %674 = vmatpush.bf16.msra.mxu0 0
  %675 = vmatpush.bf16.msra.mxu0 0
  %676 = vmatpush.bf16.msra.mxu0 0
  %677 = vmatpush.bf16.msra.mxu0 0
  %678 = vmatpush.bf16.msra.mxu0 0
  %679 = vmatpush.bf16.msra.mxu0 0
  %680 = vmatpush.bf16.msra.mxu0 %v249
  %681 = vmatpush.bf16.msra.mxu0 %v248
  %682 = vmatmul.bf16.gmra.mxu0 %v672
  %v683 = vpop.f32.mrf.mxu0
  %v684 = vadd.f32 %v71, %v683
  %v685 = vpop.f32.mrf.mxu0
  %686 = vdwg.mxu0
  %v688 = vrot.slane %v684, 5
  %v689 = vrot.slane %v684, 6
  %v690 = vrot.slane %v684, 7
  %v695 = vadd.f32 %v67, %v688
  %v696 = vadd.f32 %v68, %v689
  %v697 = vadd.f32 %v69, %v690
  %v698 = vadd.f32 %v70, %v684
  %v699 = vxor.u32 %v695, 2147483648
  %v700 = vxor.u32 %v696, 2147483648
  %v701 = vxor.u32 %v697, 2147483648
  %v702 = vxor.u32 %v698, 2147483648
  %v703 = vmul.f32 %v699, 1.442695
  %v704 = vpow.pop %v703
  %v705 = vmul.f32 %v700, 1.442695
  %v706 = vpow.pop %v705
  %v707 = vmul.f32 %v701, 1.442695
  %v708 = vpow.pop %v707
  %v709 = vmul.f32 %v702, 1.442695
  %v710 = vpow.pop %v709
  %v711 = vadd.f32 %v704, 1.0
  %v712 = vadd.f32 %v706, 1.0
  %v713 = vadd.f32 %v708, 1.0
  %v714 = vadd.f32 %v710, 1.0
  %v715 = vrcp.pop %v711
  %v716 = vmul.f32 %v711, %v715
  %v717 = vsub.f32 1.0, %v716
  %v718 = vmul.f32 %v715, %v717
  %v719 = vadd.f32 %v715, %v718
  %vm720 = vweird.f32 %v711
  %vm721 = vweird.f32 %v715
  %vm722 = vmor %vm720, %vm721
  %v723 = vsel %vm722, %v715, %v719
  %v724 = vand.u32 2147483647, %v711
  %vm725 = vcmp.eq.f32.partialorder %v724, 8.507059e+37
  %v726 = vand.u32 %v711, 2147483648
  %v727 = vor.u32 1.1754944e-38, %v726
  %v728 = vsel %vm725, %v727, %v723
  %v729 = vmul.f32 1.0, %v728
  %v730 = vrcp.pop %v712
  %v731 = vmul.f32 %v712, %v730
  %v732 = vsub.f32 1.0, %v731
  %v733 = vmul.f32 %v730, %v732
  %v734 = vadd.f32 %v730, %v733
  %vm735 = vweird.f32 %v712
  %vm736 = vweird.f32 %v730
  %vm737 = vmor %vm735, %vm736
  %v738 = vsel %vm737, %v730, %v734
  %v739 = vand.u32 2147483647, %v712
  %vm740 = vcmp.eq.f32.partialorder %v739, 8.507059e+37
  %v741 = vand.u32 %v712, 2147483648
  %v742 = vor.u32 1.1754944e-38, %v741
  %v743 = vsel %vm740, %v742, %v738
  %v744 = vmul.f32 1.0, %v743
  %v745 = vrcp.pop %v713
  %v746 = vmul.f32 %v713, %v745
  %v747 = vsub.f32 1.0, %v746
  %v748 = vmul.f32 %v745, %v747
  %v749 = vadd.f32 %v745, %v748
  %vm750 = vweird.f32 %v713
  %vm751 = vweird.f32 %v745
  %vm752 = vmor %vm750, %vm751
  %v753 = vsel %vm752, %v745, %v749
  %v754 = vand.u32 2147483647, %v713
  %vm755 = vcmp.eq.f32.partialorder %v754, 8.507059e+37
  %v756 = vand.u32 %v713, 2147483648
  %v757 = vor.u32 1.1754944e-38, %v756
  %v758 = vsel %vm755, %v757, %v753
  %v759 = vmul.f32 1.0, %v758
  %v760 = vrcp.pop %v714
  %v761 = vmul.f32 %v714, %v760
  %v762 = vsub.f32 1.0, %v761
  %v763 = vmul.f32 %v760, %v762
  %v764 = vadd.f32 %v760, %v763
  %vm765 = vweird.f32 %v714
  %vm766 = vweird.f32 %v760
  %vm767 = vmor %vm765, %vm766
  %v768 = vsel %vm767, %v760, %v764
  %v769 = vand.u32 2147483647, %v714
  %vm770 = vcmp.eq.f32.partialorder %v769, 8.507059e+37
  %v771 = vand.u32 %v714, 2147483648
  %v772 = vor.u32 1.1754944e-38, %v771
  %v773 = vsel %vm770, %v772, %v768
  %v774 = vmul.f32 1.0, %v773
  %775 = vrot.lane.b32.xlu0 %v688, 64
  %v776 = vpop.permute.xlu0 %775
  %777 = vrot.lane.b32.xlu0 %v689, 64
  %v778 = vpop.permute.xlu0 %777
  %779 = vrot.lane.b32.xlu0 %v690, 64
  %v780 = vpop.permute.xlu0 %779
  %781 = vrot.lane.b32.xlu0 %v684, 64
  %v782 = vpop.permute.xlu0 %781
  %v787 = vmul.f32 %v729, %v776
  %v788 = vmul.f32 %v744, %v778
  %v789 = vmul.f32 %v759, %v780
  %v790 = vmul.f32 %v774, %v782
  %795 = vrot.lane.b32.xlu0 %v787, 64
  %v796 = vpop.permute.xlu0 %795
  %797 = vrot.lane.b32.xlu0 %v788, 64
  %v798 = vpop.permute.xlu0 %797
  %799 = vrot.lane.b32.xlu0 %v789, 64
  %v800 = vpop.permute.xlu0 %799
  %801 = vrot.lane.b32.xlu0 %v790, 64
  %v802 = vpop.permute.xlu0 %801
  %v807 = vadd.f32 %v67, %v796
  %v808 = vadd.f32 %v68, %v798
  %v809 = vadd.f32 %v69, %v800
  %v810 = vadd.f32 %v70, %v802
  %v811 = vtanh.pop %v807
  %v812 = vtanh.pop %v808
  %v813 = vtanh.pop %v809
  %v814 = vtanh.pop %v810
  %v815 = vsub.f32 1.0, %v729
  %v816 = vsub.f32 1.0, %v744
  %v817 = vsub.f32 1.0, %v759
  %v818 = vsub.f32 1.0, %v774
  %823 = vrot.lane.b32.xlu0 %v811, 96
  %v824 = vpop.permute.xlu0 %823
  %825 = vrot.lane.b32.xlu0 %v812, 96
  %v826 = vpop.permute.xlu0 %825
  %827 = vrot.lane.b32.xlu0 %v813, 96
  %v828 = vpop.permute.xlu0 %827
  %829 = vrot.lane.b32.xlu0 %v814, 96
  %v830 = vpop.permute.xlu0 %829
  %v835 = vmul.f32 %v815, %v824
  %v836 = vmul.f32 %v816, %v826
  %v837 = vmul.f32 %v817, %v828
  %v838 = vmul.f32 %v818, %v830
  %v843 = vrot.slane %v646, 7
  %v844 = vrot.slane %v647, 7
  %v845 = vrot.slane %v648, 7
  %v846 = vrot.slane %v649, 7
  %v851 = vmul.f32 %v729, %v843
  %v852 = vmul.f32 %v744, %v844
  %v853 = vmul.f32 %v759, %v845
  %v854 = vmul.f32 %v774, %v846
  %v855 = vadd.f32 %v835, %v851
  %v856 = vadd.f32 %v836, %v852
  %v857 = vadd.f32 %v837, %v853
  %v858 = vadd.f32 %v838, %v854
  %v859 = vpack.c.bf16 %v855, %v855
  %v860 = vpack.c.bf16 %v856, %v856
  %v861 = vpack.c.bf16 %v857, %v857
  %v862 = vpack.c.bf16 %v858, %v858
  %v867 = vunpack.c.l.b16 %v859
  %v868 = vunpack.c.l.b16 %v860
  %v869 = vunpack.c.l.b16 %v861
  %v870 = vunpack.c.l.b16 %v862
  %v871 = vrot.slane %v867, 3
  %v872 = vrot.slane %v868, 2
  %v873 = vsel %vm229, %v872, %v871
  %v874 = vrot.slane %v869, 1
  %v875 = vsel %vm232, %v874, %v873
  %v876 = vsel %vm235, %v870, %v875
  %v877 = vpack.c.b16 %v876, %v876
  %878 = vrot.lane.b32.xlu0 %v877, 96
  %v879 = vpop.permute.xlu0 %878
  %v881 = vsel %vm252, %v879, 0
  %883 = vmatpush.bf16.msra.mxu0 0
  %884 = vmatpush.bf16.msra.mxu0 0
  %885 = vmatpush.bf16.msra.mxu0 0
  %886 = vmatpush.bf16.msra.mxu0 0
  %887 = vmatpush.bf16.msra.mxu0 0
  %888 = vmatpush.bf16.msra.mxu0 0
  %889 = vmatpush.bf16.msra.mxu0 %v249
  %890 = vmatpush.bf16.msra.mxu0 %v248
  %891 = vmatmul.bf16.gmra.mxu0 %v881
  %v892 = vpop.f32.mrf.mxu0
  %v893 = vadd.f32 %v71, %v892
  %v894 = vpop.f32.mrf.mxu0
  %895 = vdwg.mxu0
  %v897 = vrot.slane %v893, 4
  %v898 = vrot.slane %v893, 5
  %v899 = vrot.slane %v893, 6
  %v900 = vrot.slane %v893, 7
  %v905 = vadd.f32 %v67, %v897
  %v906 = vadd.f32 %v68, %v898
  %v907 = vadd.f32 %v69, %v899
  %v908 = vadd.f32 %v70, %v900
  %v909 = vxor.u32 %v905, 2147483648
  %v910 = vxor.u32 %v906, 2147483648
  %v911 = vxor.u32 %v907, 2147483648
  %v912 = vxor.u32 %v908, 2147483648
  %v913 = vmul.f32 %v909, 1.442695
  %v914 = vpow.pop %v913
  %v915 = vmul.f32 %v910, 1.442695
  %v916 = vpow.pop %v915
  %v917 = vmul.f32 %v911, 1.442695
  %v918 = vpow.pop %v917
  %v919 = vmul.f32 %v912, 1.442695
  %v920 = vpow.pop %v919
  %v921 = vadd.f32 %v914, 1.0
  %v922 = vadd.f32 %v916, 1.0
  %v923 = vadd.f32 %v918, 1.0
  %v924 = vadd.f32 %v920, 1.0
  %v925 = vrcp.pop %v921
  %v926 = vmul.f32 %v921, %v925
  %v927 = vsub.f32 1.0, %v926
  %v928 = vmul.f32 %v925, %v927
  %v929 = vadd.f32 %v925, %v928
  %vm930 = vweird.f32 %v921
  %vm931 = vweird.f32 %v925
  %vm932 = vmor %vm930, %vm931
  %v933 = vsel %vm932, %v925, %v929
  %v934 = vand.u32 2147483647, %v921
  %vm935 = vcmp.eq.f32.partialorder %v934, 8.507059e+37
  %v936 = vand.u32 %v921, 2147483648
  %v937 = vor.u32 1.1754944e-38, %v936
  %v938 = vsel %vm935, %v937, %v933
  %v939 = vmul.f32 1.0, %v938
  %v940 = vrcp.pop %v922
  %v941 = vmul.f32 %v922, %v940
  %v942 = vsub.f32 1.0, %v941
  %v943 = vmul.f32 %v940, %v942
  %v944 = vadd.f32 %v940, %v943
  %vm945 = vweird.f32 %v922
  %vm946 = vweird.f32 %v940
  %vm947 = vmor %vm945, %vm946
  %v948 = vsel %vm947, %v940, %v944
  %v949 = vand.u32 2147483647, %v922
  %vm950 = vcmp.eq.f32.partialorder %v949, 8.507059e+37
  %v951 = vand.u32 %v922, 2147483648
  %v952 = vor.u32 1.1754944e-38, %v951
  %v953 = vsel %vm950, %v952, %v948
  %v954 = vmul.f32 1.0, %v953
  %v955 = vrcp.pop %v923
  %v956 = vmul.f32 %v923, %v955
  %v957 = vsub.f32 1.0, %v956
  %v958 = vmul.f32 %v955, %v957
  %v959 = vadd.f32 %v955, %v958
  %vm960 = vweird.f32 %v923
  %vm961 = vweird.f32 %v955
  %vm962 = vmor %vm960, %vm961
  %v963 = vsel %vm962, %v955, %v959
  %v964 = vand.u32 2147483647, %v923
  %vm965 = vcmp.eq.f32.partialorder %v964, 8.507059e+37
  %v966 = vand.u32 %v923, 2147483648
  %v967 = vor.u32 1.1754944e-38, %v966
  %v968 = vsel %vm965, %v967, %v963
  %v969 = vmul.f32 1.0, %v968
  %v970 = vrcp.pop %v924
  %v971 = vmul.f32 %v924, %v970
  %v972 = vsub.f32 1.0, %v971
  %v973 = vmul.f32 %v970, %v972
  %v974 = vadd.f32 %v970, %v973
  %vm975 = vweird.f32 %v924
  %vm976 = vweird.f32 %v970
  %vm977 = vmor %vm975, %vm976
  %v978 = vsel %vm977, %v970, %v974
  %v979 = vand.u32 2147483647, %v924
  %vm980 = vcmp.eq.f32.partialorder %v979, 8.507059e+37
  %v981 = vand.u32 %v924, 2147483648
  %v982 = vor.u32 1.1754944e-38, %v981
  %v983 = vsel %vm980, %v982, %v978
  %v984 = vmul.f32 1.0, %v983
  %985 = vrot.lane.b32.xlu0 %v897, 64
  %v986 = vpop.permute.xlu0 %985
  %987 = vrot.lane.b32.xlu0 %v898, 64
  %v988 = vpop.permute.xlu0 %987
  %989 = vrot.lane.b32.xlu0 %v899, 64
  %v990 = vpop.permute.xlu0 %989
  %991 = vrot.lane.b32.xlu0 %v900, 64
  %v992 = vpop.permute.xlu0 %991
  %v997 = vmul.f32 %v939, %v986
  %v998 = vmul.f32 %v954, %v988
  %v999 = vmul.f32 %v969, %v990
  %v1000 = vmul.f32 %v984, %v992
  %1005 = vrot.lane.b32.xlu0 %v997, 64
  %v1006 = vpop.permute.xlu0 %1005
  %1007 = vrot.lane.b32.xlu0 %v998, 64
  %v1008 = vpop.permute.xlu0 %1007
  %1009 = vrot.lane.b32.xlu0 %v999, 64
  %v1010 = vpop.permute.xlu0 %1009
  %1011 = vrot.lane.b32.xlu0 %v1000, 64
  %v1012 = vpop.permute.xlu0 %1011
  %v1017 = vadd.f32 %v67, %v1006
  %v1018 = vadd.f32 %v68, %v1008
  %v1019 = vadd.f32 %v69, %v1010
  %v1020 = vadd.f32 %v70, %v1012
  %v1021 = vtanh.pop %v1017
  %v1022 = vtanh.pop %v1018
  %v1023 = vtanh.pop %v1019
  %v1024 = vtanh.pop %v1020
  %v1025 = vsub.f32 1.0, %v939
  %v1026 = vsub.f32 1.0, %v954
  %v1027 = vsub.f32 1.0, %v969
  %v1028 = vsub.f32 1.0, %v984
  %1033 = vrot.lane.b32.xlu0 %v1021, 96
  %v1034 = vpop.permute.xlu0 %1033
  %1035 = vrot.lane.b32.xlu0 %v1022, 96
  %v1036 = vpop.permute.xlu0 %1035
  %1037 = vrot.lane.b32.xlu0 %v1023, 96
  %v1038 = vpop.permute.xlu0 %1037
  %1039 = vrot.lane.b32.xlu0 %v1024, 96
  %v1040 = vpop.permute.xlu0 %1039
  %v1045 = vmul.f32 %v1025, %v1034
  %v1046 = vmul.f32 %v1026, %v1036
  %v1047 = vmul.f32 %v1027, %v1038
  %v1048 = vmul.f32 %v1028, %v1040
  %v1053 = vrot.slane %v855, 7
  %v1054 = vrot.slane %v856, 7
  %v1055 = vrot.slane %v857, 7
  %v1056 = vrot.slane %v858, 7
  %v1061 = vmul.f32 %v939, %v1053
  %v1062 = vmul.f32 %v954, %v1054
  %v1063 = vmul.f32 %v969, %v1055
  %v1064 = vmul.f32 %v984, %v1056
  %v1065 = vadd.f32 %v1045, %v1061
  %v1066 = vadd.f32 %v1046, %v1062
  %v1067 = vadd.f32 %v1047, %v1063
  %v1068 = vadd.f32 %v1048, %v1064
  %v1069 = vpack.c.bf16 %v1065, %v1065
  %v1070 = vpack.c.bf16 %v1066, %v1066
  %v1071 = vpack.c.bf16 %v1067, %v1067
  %v1072 = vpack.c.bf16 %v1068, %v1068
  %v1077 = vunpack.c.l.b16 %v1069
  %v1078 = vunpack.c.l.b16 %v1070
  %v1079 = vunpack.c.l.b16 %v1071
  %v1080 = vunpack.c.l.b16 %v1072
  %v1081 = vrot.slane %v1077, 4
  %v1082 = vrot.slane %v1078, 3
  %v1083 = vsel %vm229, %v1082, %v1081
  %v1084 = vrot.slane %v1079, 2
  %v1085 = vsel %vm232, %v1084, %v1083
  %v1086 = vrot.slane %v1080, 1
  %v1087 = vsel %vm235, %v1086, %v1085
  %v1088 = vpack.c.b16 %v1087, %v1087
  %1089 = vrot.lane.b32.xlu0 %v1088, 96
  %v1090 = vpop.permute.xlu0 %1089
  %v1092 = vsel %vm252, %v1090, 0
  %1094 = vmatpush.bf16.msra.mxu0 0
  %1095 = vmatpush.bf16.msra.mxu0 0
  %1096 = vmatpush.bf16.msra.mxu0 0
  %1097 = vmatpush.bf16.msra.mxu0 0
  %1098 = vmatpush.bf16.msra.mxu0 0
  %1099 = vmatpush.bf16.msra.mxu0 0
  %1100 = vmatpush.bf16.msra.mxu0 %v249
  %1101 = vmatpush.bf16.msra.mxu0 %v248
  %1102 = vmatmul.bf16.gmra.mxu0 %v1092
  %v1103 = vpop.f32.mrf.mxu0
  %v1104 = vadd.f32 %v71, %v1103
  %v1105 = vpop.f32.mrf.mxu0
  %1106 = vdwg.mxu0
  %v1108 = vrot.slane %v1104, 3
  %v1109 = vrot.slane %v1104, 4
  %v1110 = vrot.slane %v1104, 5
  %v1111 = vrot.slane %v1104, 6
  %v1116 = vadd.f32 %v67, %v1108
  %v1117 = vadd.f32 %v68, %v1109
  %v1118 = vadd.f32 %v69, %v1110
  %v1119 = vadd.f32 %v70, %v1111
  %v1120 = vxor.u32 %v1116, 2147483648
  %v1121 = vxor.u32 %v1117, 2147483648
  %v1122 = vxor.u32 %v1118, 2147483648
  %v1123 = vxor.u32 %v1119, 2147483648
  %v1124 = vmul.f32 %v1120, 1.442695
  %v1125 = vpow.pop %v1124
  %v1126 = vmul.f32 %v1121, 1.442695
  %v1127 = vpow.pop %v1126
  %v1128 = vmul.f32 %v1122, 1.442695
  %v1129 = vpow.pop %v1128
  %v1130 = vmul.f32 %v1123, 1.442695
  %v1131 = vpow.pop %v1130
  %v1132 = vadd.f32 %v1125, 1.0
  %v1133 = vadd.f32 %v1127, 1.0
  %v1134 = vadd.f32 %v1129, 1.0
  %v1135 = vadd.f32 %v1131, 1.0
  %v1136 = vrcp.pop %v1132
  %v1137 = vmul.f32 %v1132, %v1136
  %v1138 = vsub.f32 1.0, %v1137
  %v1139 = vmul.f32 %v1136, %v1138
  %v1140 = vadd.f32 %v1136, %v1139
  %vm1141 = vweird.f32 %v1132
  %vm1142 = vweird.f32 %v1136
  %vm1143 = vmor %vm1141, %vm1142
  %v1144 = vsel %vm1143, %v1136, %v1140
  %v1145 = vand.u32 2147483647, %v1132
  %vm1146 = vcmp.eq.f32.partialorder %v1145, 8.507059e+37
  %v1147 = vand.u32 %v1132, 2147483648
  %v1148 = vor.u32 1.1754944e-38, %v1147
  %v1149 = vsel %vm1146, %v1148, %v1144
  %v1150 = vmul.f32 1.0, %v1149
  %v1151 = vrcp.pop %v1133
  %v1152 = vmul.f32 %v1133, %v1151
  %v1153 = vsub.f32 1.0, %v1152
  %v1154 = vmul.f32 %v1151, %v1153
  %v1155 = vadd.f32 %v1151, %v1154
  %vm1156 = vweird.f32 %v1133
  %vm1157 = vweird.f32 %v1151
  %vm1158 = vmor %vm1156, %vm1157
  %v1159 = vsel %vm1158, %v1151, %v1155
  %v1160 = vand.u32 2147483647, %v1133
  %vm1161 = vcmp.eq.f32.partialorder %v1160, 8.507059e+37
  %v1162 = vand.u32 %v1133, 2147483648
  %v1163 = vor.u32 1.1754944e-38, %v1162
  %v1164 = vsel %vm1161, %v1163, %v1159
  %v1165 = vmul.f32 1.0, %v1164
  %v1166 = vrcp.pop %v1134
  %v1167 = vmul.f32 %v1134, %v1166
  %v1168 = vsub.f32 1.0, %v1167
  %v1169 = vmul.f32 %v1166, %v1168
  %v1170 = vadd.f32 %v1166, %v1169
  %vm1171 = vweird.f32 %v1134
  %vm1172 = vweird.f32 %v1166
  %vm1173 = vmor %vm1171, %vm1172
  %v1174 = vsel %vm1173, %v1166, %v1170
  %v1175 = vand.u32 2147483647, %v1134
  %vm1176 = vcmp.eq.f32.partialorder %v1175, 8.507059e+37
  %v1177 = vand.u32 %v1134, 2147483648
  %v1178 = vor.u32 1.1754944e-38, %v1177
  %v1179 = vsel %vm1176, %v1178, %v1174
  %v1180 = vmul.f32 1.0, %v1179
  %v1181 = vrcp.pop %v1135
  %v1182 = vmul.f32 %v1135, %v1181
  %v1183 = vsub.f32 1.0, %v1182
  %v1184 = vmul.f32 %v1181, %v1183
  %v1185 = vadd.f32 %v1181, %v1184
  %vm1186 = vweird.f32 %v1135
  %vm1187 = vweird.f32 %v1181
  %vm1188 = vmor %vm1186, %vm1187
  %v1189 = vsel %vm1188, %v1181, %v1185
  %v1190 = vand.u32 2147483647, %v1135
  %vm1191 = vcmp.eq.f32.partialorder %v1190, 8.507059e+37
  %v1192 = vand.u32 %v1135, 2147483648
  %v1193 = vor.u32 1.1754944e-38, %v1192
  %v1194 = vsel %vm1191, %v1193, %v1189
  %v1195 = vmul.f32 1.0, %v1194
  %1196 = vrot.lane.b32.xlu0 %v1108, 64
  %v1197 = vpop.permute.xlu0 %1196
  %1198 = vrot.lane.b32.xlu0 %v1109, 64
  %v1199 = vpop.permute.xlu0 %1198
  %1200 = vrot.lane.b32.xlu0 %v1110, 64
  %v1201 = vpop.permute.xlu0 %1200
  %1202 = vrot.lane.b32.xlu0 %v1111, 64
  %v1203 = vpop.permute.xlu0 %1202
  %v1208 = vmul.f32 %v1150, %v1197
  %v1209 = vmul.f32 %v1165, %v1199
  %v1210 = vmul.f32 %v1180, %v1201
  %v1211 = vmul.f32 %v1195, %v1203
  %1216 = vrot.lane.b32.xlu0 %v1208, 64
  %v1217 = vpop.permute.xlu0 %1216
  %1218 = vrot.lane.b32.xlu0 %v1209, 64
  %v1219 = vpop.permute.xlu0 %1218
  %1220 = vrot.lane.b32.xlu0 %v1210, 64
  %v1221 = vpop.permute.xlu0 %1220
  %1222 = vrot.lane.b32.xlu0 %v1211, 64
  %v1223 = vpop.permute.xlu0 %1222
  %v1228 = vadd.f32 %v67, %v1217
  %v1229 = vadd.f32 %v68, %v1219
  %v1230 = vadd.f32 %v69, %v1221
  %v1231 = vadd.f32 %v70, %v1223
  %v1232 = vtanh.pop %v1228
  %v1233 = vtanh.pop %v1229
  %v1234 = vtanh.pop %v1230
  %v1235 = vtanh.pop %v1231
  %v1236 = vsub.f32 1.0, %v1150
  %v1237 = vsub.f32 1.0, %v1165
  %v1238 = vsub.f32 1.0, %v1180
  %v1239 = vsub.f32 1.0, %v1195
  %1244 = vrot.lane.b32.xlu0 %v1232, 96
  %v1245 = vpop.permute.xlu0 %1244
  %1246 = vrot.lane.b32.xlu0 %v1233, 96
  %v1247 = vpop.permute.xlu0 %1246
  %1248 = vrot.lane.b32.xlu0 %v1234, 96
  %v1249 = vpop.permute.xlu0 %1248
  %1250 = vrot.lane.b32.xlu0 %v1235, 96
  %v1251 = vpop.permute.xlu0 %1250
  %v1256 = vmul.f32 %v1236, %v1245
  %v1257 = vmul.f32 %v1237, %v1247
  %v1258 = vmul.f32 %v1238, %v1249
  %v1259 = vmul.f32 %v1239, %v1251
  %v1264 = vrot.slane %v1065, 7
  %v1265 = vrot.slane %v1066, 7
  %v1266 = vrot.slane %v1067, 7
  %v1267 = vrot.slane %v1068, 7
  %v1272 = vmul.f32 %v1150, %v1264
  %v1273 = vmul.f32 %v1165, %v1265
  %v1274 = vmul.f32 %v1180, %v1266
  %v1275 = vmul.f32 %v1195, %v1267
  %v1276 = vadd.f32 %v1256, %v1272
  %v1277 = vadd.f32 %v1257, %v1273
  %v1278 = vadd.f32 %v1258, %v1274
  %v1279 = vadd.f32 %v1259, %v1275
  %v1280 = vpack.c.bf16 %v1276, %v1276
  %v1281 = vpack.c.bf16 %v1277, %v1277
  %v1282 = vpack.c.bf16 %v1278, %v1278
  %v1283 = vpack.c.bf16 %v1279, %v1279
  %v1288 = vunpack.c.l.b16 %v1280
  %v1289 = vunpack.c.l.b16 %v1281
  %v1290 = vunpack.c.l.b16 %v1282
  %v1291 = vunpack.c.l.b16 %v1283
  %v1292 = vrot.slane %v1288, 5
  %v1293 = vrot.slane %v1289, 4
  %v1294 = vsel %vm229, %v1293, %v1292
  %v1295 = vrot.slane %v1290, 3
  %v1296 = vsel %vm232, %v1295, %v1294
  %v1297 = vrot.slane %v1291, 2
  %v1298 = vsel %vm235, %v1297, %v1296
  %v1299 = vpack.c.b16 %v1298, %v1298
  %1300 = vrot.lane.b32.xlu0 %v1299, 96
  %v1301 = vpop.permute.xlu0 %1300
  %v1303 = vsel %vm252, %v1301, 0
  %1305 = vmatpush.bf16.msra.mxu0 0
  %1306 = vmatpush.bf16.msra.mxu0 0
  %1307 = vmatpush.bf16.msra.mxu0 0
  %1308 = vmatpush.bf16.msra.mxu0 0
  %1309 = vmatpush.bf16.msra.mxu0 0
  %1310 = vmatpush.bf16.msra.mxu0 0
  %1311 = vmatpush.bf16.msra.mxu0 %v249
  %1312 = vmatpush.bf16.msra.mxu0 %v248
  %1313 = vmatmul.bf16.gmra.mxu0 %v1303
  %v1314 = vpop.f32.mrf.mxu0
  %v1315 = vadd.f32 %v71, %v1314
  %v1316 = vpop.f32.mrf.mxu0
  %1317 = vdwg.mxu0
  %v1319 = vrot.slane %v1315, 2
  %v1320 = vrot.slane %v1315, 3
  %v1321 = vrot.slane %v1315, 4
  %v1322 = vrot.slane %v1315, 5
  %v1327 = vadd.f32 %v67, %v1319
  %v1328 = vadd.f32 %v68, %v1320
  %v1329 = vadd.f32 %v69, %v1321
  %v1330 = vadd.f32 %v70, %v1322
  %v1331 = vxor.u32 %v1327, 2147483648
  %v1332 = vxor.u32 %v1328, 2147483648
  %v1333 = vxor.u32 %v1329, 2147483648
  %v1334 = vxor.u32 %v1330, 2147483648
  %v1335 = vmul.f32 %v1331, 1.442695
  %v1336 = vpow.pop %v1335
  %v1337 = vmul.f32 %v1332, 1.442695
  %v1338 = vpow.pop %v1337
  %v1339 = vmul.f32 %v1333, 1.442695
  %v1340 = vpow.pop %v1339
  %v1341 = vmul.f32 %v1334, 1.442695
  %v1342 = vpow.pop %v1341
  %v1343 = vadd.f32 %v1336, 1.0
  %v1344 = vadd.f32 %v1338, 1.0
  %v1345 = vadd.f32 %v1340, 1.0
  %v1346 = vadd.f32 %v1342, 1.0
  %v1347 = vrcp.pop %v1343
  %v1348 = vmul.f32 %v1343, %v1347
  %v1349 = vsub.f32 1.0, %v1348
  %v1350 = vmul.f32 %v1347, %v1349
  %v1351 = vadd.f32 %v1347, %v1350
  %vm1352 = vweird.f32 %v1343
  %vm1353 = vweird.f32 %v1347
  %vm1354 = vmor %vm1352, %vm1353
  %v1355 = vsel %vm1354, %v1347, %v1351
  %v1356 = vand.u32 2147483647, %v1343
  %vm1357 = vcmp.eq.f32.partialorder %v1356, 8.507059e+37
  %v1358 = vand.u32 %v1343, 2147483648
  %v1359 = vor.u32 1.1754944e-38, %v1358
  %v1360 = vsel %vm1357, %v1359, %v1355
  %v1361 = vmul.f32 1.0, %v1360
  %v1362 = vrcp.pop %v1344
  %v1363 = vmul.f32 %v1344, %v1362
  %v1364 = vsub.f32 1.0, %v1363
  %v1365 = vmul.f32 %v1362, %v1364
  %v1366 = vadd.f32 %v1362, %v1365
  %vm1367 = vweird.f32 %v1344
  %vm1368 = vweird.f32 %v1362
  %vm1369 = vmor %vm1367, %vm1368
  %v1370 = vsel %vm1369, %v1362, %v1366
  %v1371 = vand.u32 2147483647, %v1344
  %vm1372 = vcmp.eq.f32.partialorder %v1371, 8.507059e+37
  %v1373 = vand.u32 %v1344, 2147483648
  %v1374 = vor.u32 1.1754944e-38, %v1373
  %v1375 = vsel %vm1372, %v1374, %v1370
  %v1376 = vmul.f32 1.0, %v1375
  %v1377 = vrcp.pop %v1345
  %v1378 = vmul.f32 %v1345, %v1377
  %v1379 = vsub.f32 1.0, %v1378
  %v1380 = vmul.f32 %v1377, %v1379
  %v1381 = vadd.f32 %v1377, %v1380
  %vm1382 = vweird.f32 %v1345
  %vm1383 = vweird.f32 %v1377
  %vm1384 = vmor %vm1382, %vm1383
  %v1385 = vsel %vm1384, %v1377, %v1381
  %v1386 = vand.u32 2147483647, %v1345
  %vm1387 = vcmp.eq.f32.partialorder %v1386, 8.507059e+37
  %v1388 = vand.u32 %v1345, 2147483648
  %v1389 = vor.u32 1.1754944e-38, %v1388
  %v1390 = vsel %vm1387, %v1389, %v1385
  %v1391 = vmul.f32 1.0, %v1390
  %v1392 = vrcp.pop %v1346
  %v1393 = vmul.f32 %v1346, %v1392
  %v1394 = vsub.f32 1.0, %v1393
  %v1395 = vmul.f32 %v1392, %v1394
  %v1396 = vadd.f32 %v1392, %v1395
  %vm1397 = vweird.f32 %v1346
  %vm1398 = vweird.f32 %v1392
  %vm1399 = vmor %vm1397, %vm1398
  %v1400 = vsel %vm1399, %v1392, %v1396
  %v1401 = vand.u32 2147483647, %v1346
  %vm1402 = vcmp.eq.f32.partialorder %v1401, 8.507059e+37
  %v1403 = vand.u32 %v1346, 2147483648
  %v1404 = vor.u32 1.1754944e-38, %v1403
  %v1405 = vsel %vm1402, %v1404, %v1400
  %v1406 = vmul.f32 1.0, %v1405
  %1407 = vrot.lane.b32.xlu0 %v1319, 64
  %v1408 = vpop.permute.xlu0 %1407
  %1409 = vrot.lane.b32.xlu0 %v1320, 64
  %v1410 = vpop.permute.xlu0 %1409
  %1411 = vrot.lane.b32.xlu0 %v1321, 64
  %v1412 = vpop.permute.xlu0 %1411
  %1413 = vrot.lane.b32.xlu0 %v1322, 64
  %v1414 = vpop.permute.xlu0 %1413
  %v1419 = vmul.f32 %v1361, %v1408
  %v1420 = vmul.f32 %v1376, %v1410
  %v1421 = vmul.f32 %v1391, %v1412
  %v1422 = vmul.f32 %v1406, %v1414
  %1427 = vrot.lane.b32.xlu0 %v1419, 64
  %v1428 = vpop.permute.xlu0 %1427
  %1429 = vrot.lane.b32.xlu0 %v1420, 64
  %v1430 = vpop.permute.xlu0 %1429
  %1431 = vrot.lane.b32.xlu0 %v1421, 64
  %v1432 = vpop.permute.xlu0 %1431
  %1433 = vrot.lane.b32.xlu0 %v1422, 64
  %v1434 = vpop.permute.xlu0 %1433
  %v1439 = vadd.f32 %v67, %v1428
  %v1440 = vadd.f32 %v68, %v1430
  %v1441 = vadd.f32 %v69, %v1432
  %v1442 = vadd.f32 %v70, %v1434
  %v1443 = vtanh.pop %v1439
  %v1444 = vtanh.pop %v1440
  %v1445 = vtanh.pop %v1441
  %v1446 = vtanh.pop %v1442
  %v1447 = vsub.f32 1.0, %v1361
  %v1448 = vsub.f32 1.0, %v1376
  %v1449 = vsub.f32 1.0, %v1391
  %v1450 = vsub.f32 1.0, %v1406
  %1455 = vrot.lane.b32.xlu0 %v1443, 96
  %v1456 = vpop.permute.xlu0 %1455
  %1457 = vrot.lane.b32.xlu0 %v1444, 96
  %v1458 = vpop.permute.xlu0 %1457
  %1459 = vrot.lane.b32.xlu0 %v1445, 96
  %v1460 = vpop.permute.xlu0 %1459
  %1461 = vrot.lane.b32.xlu0 %v1446, 96
  %v1462 = vpop.permute.xlu0 %1461
  %v1467 = vmul.f32 %v1447, %v1456
  %v1468 = vmul.f32 %v1448, %v1458
  %v1469 = vmul.f32 %v1449, %v1460
  %v1470 = vmul.f32 %v1450, %v1462
  %v1475 = vrot.slane %v1276, 7
  %v1476 = vrot.slane %v1277, 7
  %v1477 = vrot.slane %v1278, 7
  %v1478 = vrot.slane %v1279, 7
  %v1483 = vmul.f32 %v1361, %v1475
  %v1484 = vmul.f32 %v1376, %v1476
  %v1485 = vmul.f32 %v1391, %v1477
  %v1486 = vmul.f32 %v1406, %v1478
  %v1487 = vadd.f32 %v1467, %v1483
  %v1488 = vadd.f32 %v1468, %v1484
  %v1489 = vadd.f32 %v1469, %v1485
  %v1490 = vadd.f32 %v1470, %v1486
  %v1491 = vpack.c.bf16 %v1487, %v1487
  %v1492 = vpack.c.bf16 %v1488, %v1488
  %v1493 = vpack.c.bf16 %v1489, %v1489
  %v1494 = vpack.c.bf16 %v1490, %v1490
  %v1499 = vunpack.c.l.b16 %v1491
  %v1500 = vunpack.c.l.b16 %v1492
  %v1501 = vunpack.c.l.b16 %v1493
  %v1502 = vunpack.c.l.b16 %v1494
  %v1503 = vrot.slane %v1499, 6
  %v1504 = vrot.slane %v1500, 5
  %v1505 = vsel %vm229, %v1504, %v1503
  %v1506 = vrot.slane %v1501, 4
  %v1507 = vsel %vm232, %v1506, %v1505
  %v1508 = vrot.slane %v1502, 3
  %v1509 = vsel %vm235, %v1508, %v1507
  %v1510 = vpack.c.b16 %v1509, %v1509
  %1511 = vrot.lane.b32.xlu0 %v1510, 96
  %v1512 = vpop.permute.xlu0 %1511
  %v1514 = vsel %vm252, %v1512, 0
  %1516 = vmatpush.bf16.msra.mxu0 0
  %1517 = vmatpush.bf16.msra.mxu0 0
  %1518 = vmatpush.bf16.msra.mxu0 0
  %1519 = vmatpush.bf16.msra.mxu0 0
  %1520 = vmatpush.bf16.msra.mxu0 0
  %1521 = vmatpush.bf16.msra.mxu0 0
  %1522 = vmatpush.bf16.msra.mxu0 %v249
  %1523 = vmatpush.bf16.msra.mxu0 %v248
  %1524 = vmatmul.bf16.gmra.mxu0 %v1514
  %v1525 = vpop.f32.mrf.mxu0
  %v1526 = vadd.f32 %v71, %v1525
  %v1527 = vpop.f32.mrf.mxu0
  %1528 = vdwg.mxu0
  %v1530 = vrot.slane %v1526, 1
  %v1531 = vrot.slane %v1526, 2
  %v1532 = vrot.slane %v1526, 3
  %v1533 = vrot.slane %v1526, 4
  %v1538 = vadd.f32 %v67, %v1530
  %v1539 = vadd.f32 %v68, %v1531
  %v1540 = vadd.f32 %v69, %v1532
  %v1541 = vadd.f32 %v70, %v1533
  %v1542 = vxor.u32 %v1538, 2147483648
  %v1543 = vxor.u32 %v1539, 2147483648
  %v1544 = vxor.u32 %v1540, 2147483648
  %v1545 = vxor.u32 %v1541, 2147483648
  %v1546 = vmul.f32 %v1542, 1.442695
  %v1547 = vpow.pop %v1546
  %v1548 = vmul.f32 %v1543, 1.442695
  %v1549 = vpow.pop %v1548
  %v1550 = vmul.f32 %v1544, 1.442695
  %v1551 = vpow.pop %v1550
  %v1552 = vmul.f32 %v1545, 1.442695
  %v1553 = vpow.pop %v1552
  %v1554 = vadd.f32 %v1547, 1.0
  %v1555 = vadd.f32 %v1549, 1.0
  %v1556 = vadd.f32 %v1551, 1.0
  %v1557 = vadd.f32 %v1553, 1.0
  %v1558 = vrcp.pop %v1554
  %v1559 = vmul.f32 %v1554, %v1558
  %v1560 = vsub.f32 1.0, %v1559
  %v1561 = vmul.f32 %v1558, %v1560
  %v1562 = vadd.f32 %v1558, %v1561
  %vm1563 = vweird.f32 %v1554
  %vm1564 = vweird.f32 %v1558
  %vm1565 = vmor %vm1563, %vm1564
  %v1566 = vsel %vm1565, %v1558, %v1562
  %v1567 = vand.u32 2147483647, %v1554
  %vm1568 = vcmp.eq.f32.partialorder %v1567, 8.507059e+37
  %v1569 = vand.u32 %v1554, 2147483648
  %v1570 = vor.u32 1.1754944e-38, %v1569
  %v1571 = vsel %vm1568, %v1570, %v1566
  %v1572 = vmul.f32 1.0, %v1571
  %v1573 = vrcp.pop %v1555
  %v1574 = vmul.f32 %v1555, %v1573
  %v1575 = vsub.f32 1.0, %v1574
  %v1576 = vmul.f32 %v1573, %v1575
  %v1577 = vadd.f32 %v1573, %v1576
  %vm1578 = vweird.f32 %v1555
  %vm1579 = vweird.f32 %v1573
  %vm1580 = vmor %vm1578, %vm1579
  %v1581 = vsel %vm1580, %v1573, %v1577
  %v1582 = vand.u32 2147483647, %v1555
  %vm1583 = vcmp.eq.f32.partialorder %v1582, 8.507059e+37
  %v1584 = vand.u32 %v1555, 2147483648
  %v1585 = vor.u32 1.1754944e-38, %v1584
  %v1586 = vsel %vm1583, %v1585, %v1581
  %v1587 = vmul.f32 1.0, %v1586
  %v1588 = vrcp.pop %v1556
  %v1589 = vmul.f32 %v1556, %v1588
  %v1590 = vsub.f32 1.0, %v1589
  %v1591 = vmul.f32 %v1588, %v1590
  %v1592 = vadd.f32 %v1588, %v1591
  %vm1593 = vweird.f32 %v1556
  %vm1594 = vweird.f32 %v1588
  %vm1595 = vmor %vm1593, %vm1594
  %v1596 = vsel %vm1595, %v1588, %v1592
  %v1597 = vand.u32 2147483647, %v1556
  %vm1598 = vcmp.eq.f32.partialorder %v1597, 8.507059e+37
  %v1599 = vand.u32 %v1556, 2147483648
  %v1600 = vor.u32 1.1754944e-38, %v1599
  %v1601 = vsel %vm1598, %v1600, %v1596
  %v1602 = vmul.f32 1.0, %v1601
  %v1603 = vrcp.pop %v1557
  %v1604 = vmul.f32 %v1557, %v1603
  %v1605 = vsub.f32 1.0, %v1604
  %v1606 = vmul.f32 %v1603, %v1605
  %v1607 = vadd.f32 %v1603, %v1606
  %vm1608 = vweird.f32 %v1557
  %vm1609 = vweird.f32 %v1603
  %vm1610 = vmor %vm1608, %vm1609
  %v1611 = vsel %vm1610, %v1603, %v1607
  %v1612 = vand.u32 2147483647, %v1557
  %vm1613 = vcmp.eq.f32.partialorder %v1612, 8.507059e+37
  %v1614 = vand.u32 %v1557, 2147483648
  %v1615 = vor.u32 1.1754944e-38, %v1614
  %v1616 = vsel %vm1613, %v1615, %v1611
  %v1617 = vmul.f32 1.0, %v1616
  %1618 = vrot.lane.b32.xlu0 %v1530, 64
  %v1619 = vpop.permute.xlu0 %1618
  %1620 = vrot.lane.b32.xlu0 %v1531, 64
  %v1621 = vpop.permute.xlu0 %1620
  %1622 = vrot.lane.b32.xlu0 %v1532, 64
  %v1623 = vpop.permute.xlu0 %1622
  %1624 = vrot.lane.b32.xlu0 %v1533, 64
  %v1625 = vpop.permute.xlu0 %1624
  %v1630 = vmul.f32 %v1572, %v1619
  %v1631 = vmul.f32 %v1587, %v1621
  %v1632 = vmul.f32 %v1602, %v1623
  %v1633 = vmul.f32 %v1617, %v1625
  %1638 = vrot.lane.b32.xlu0 %v1630, 64
  %v1639 = vpop.permute.xlu0 %1638
  %1640 = vrot.lane.b32.xlu0 %v1631, 64
  %v1641 = vpop.permute.xlu0 %1640
  %1642 = vrot.lane.b32.xlu0 %v1632, 64
  %v1643 = vpop.permute.xlu0 %1642
  %1644 = vrot.lane.b32.xlu0 %v1633, 64
  %v1645 = vpop.permute.xlu0 %1644
  %v1650 = vadd.f32 %v67, %v1639
  %v1651 = vadd.f32 %v68, %v1641
  %v1652 = vadd.f32 %v69, %v1643
  %v1653 = vadd.f32 %v70, %v1645
  %v1654 = vtanh.pop %v1650
  %v1655 = vtanh.pop %v1651
  %v1656 = vtanh.pop %v1652
  %v1657 = vtanh.pop %v1653
  %v1658 = vsub.f32 1.0, %v1572
  %v1659 = vsub.f32 1.0, %v1587
  %v1660 = vsub.f32 1.0, %v1602
  %v1661 = vsub.f32 1.0, %v1617
  %1666 = vrot.lane.b32.xlu0 %v1654, 96
  %v1667 = vpop.permute.xlu0 %1666
  %1668 = vrot.lane.b32.xlu0 %v1655, 96
  %v1669 = vpop.permute.xlu0 %1668
  %1670 = vrot.lane.b32.xlu0 %v1656, 96
  %v1671 = vpop.permute.xlu0 %1670
  %1672 = vrot.lane.b32.xlu0 %v1657, 96
  %v1673 = vpop.permute.xlu0 %1672
  %v1678 = vmul.f32 %v1658, %v1667
  %v1679 = vmul.f32 %v1659, %v1669
  %v1680 = vmul.f32 %v1660, %v1671
  %v1681 = vmul.f32 %v1661, %v1673
  %v1686 = vrot.slane %v1487, 7
  %v1687 = vrot.slane %v1488, 7
  %v1688 = vrot.slane %v1489, 7
  %v1689 = vrot.slane %v1490, 7
  %v1694 = vmul.f32 %v1572, %v1686
  %v1695 = vmul.f32 %v1587, %v1687
  %v1696 = vmul.f32 %v1602, %v1688
  %v1697 = vmul.f32 %v1617, %v1689
  %v1698 = vadd.f32 %v1678, %v1694
  %v1699 = vadd.f32 %v1679, %v1695
  %v1700 = vadd.f32 %v1680, %v1696
  %v1701 = vadd.f32 %v1681, %v1697
  %v1702 = vld [vmem:[%s1] sm:$0xff]
  %v1703 = vld [vmem:[%s1 + $0x8] sm:$0xff]
  %v1704 = vld [vmem:[%s1 + $0x10] sm:$0xff]
  %v1705 = vld [vmem:[%s1 + $0x18] sm:$0xff]
  %v1706 = vld [vmem:[%s3] sm:$0xff]
  %v1707 = vld [vmem:[%s3 + $0x8] sm:$0xf]
  %v1708 = vperm.slane %v39, 0
  %vm1709 = vcmask 97280
  %v1711 = vsel %vm1709, %v1702, 0
  %v1714 = vsel %vm1709, %v1703, 0
  %v1717 = vsel %vm1709, %v1704, 0
  %v1720 = vsel %vm1709, %v1705, 0
  %vm1722 = vcmask 1043456
  %v1724 = vsel %vm1722, %v1707, 0
  %1726 = vmatpush.msra.mxu0 0.0
  %1727 = vmatpush.msra.mxu0 0.0
  %1728 = vmatpush.msra.mxu0 0.0
  %1729 = vmatpush.msra.mxu0 0.0
  %1730 = vmatpush.msra.mxu0 0.0
  %1731 = vmatpush.msra.mxu0 0.0
  %1732 = vmatpush.msra.mxu0 0.0
  %1733 = vmatpush.msra.mxu0 0.0
  %1734 = vmatpush.msra.mxu0 0.0
  %1735 = vmatpush.msra.mxu0 0.0
  %1736 = vmatpush.msra.mxu0 0.0
  %1737 = vmatpush.msra.mxu0 0.0
  %1738 = vmatpush.msra.mxu0 0.0
  %1739 = vmatpush.msra.mxu0 0.0
  %1740 = vmatpush.msra.mxu0 %v1724
  %1741 = vmatpush.msra.mxu0 %v1706
  %1742 = vmatmul.f32.gmra.mxu0 %v1711
  %v1743 = vpop.f32.mrf.mxu0
  %v1744 = vadd.f32 %v1708, %v1743
  %1745 = vmatmul.f32.gmra.mxu0 %v1714
  %v1746 = vpop.f32.mrf.mxu0
  %v1747 = vadd.f32 %v1708, %v1746
  %1748 = vmatmul.f32.gmra.mxu0 %v1717
  %v1749 = vpop.f32.mrf.mxu0
  %v1750 = vadd.f32 %v1708, %v1749
  %1751 = vmatmul.f32.gmra.mxu0 %v1720
  %v1752 = vpop.f32.mrf.mxu0
  %v1753 = vadd.f32 %v1708, %v1752
  %1754 = vdwg.mxu0
  %v1755 = vperm.slane %v38, 0
  %1757 = vrot.lane.b32.xlu0 %v1755, 32
  %v1758 = vpop.permute.xlu0 %1757
  %v1760 = vmul.f32 %v1698, %v1758
  %v1761 = vmul.f32 %v1699, %v1758
  %v1762 = vmul.f32 %v1700, %v1758
  %v1763 = vmul.f32 %v1701, %v1758
  %v1768 = vrot.slane %v1761, 7
  %v1769 = vrot.slane %v1762, 6
  %v1770 = vsel %vm229, %v1769, %v1768
  %v1771 = vrot.slane %v1763, 5
  %v1772 = vsel %vm232, %v1771, %v1770
  %1773 = vrot.lane.b32.xlu0 %v1760, 96
  %v1774 = vpop.permute.xlu0 %1773
  %1775 = vrot.lane.b32.xlu0 %v1772, 96
  %v1776 = vpop.permute.xlu0 %1775
  %vm1779 = vcmask 261127
  %v1780 = vsel %vm1779, %v1774, 0.0
  %1781 = vadd.xlane.f32.xlu0 %v1780
  %v1782 = vpop.xlane.xlu0 %1781
  %vm1783 = vcmask 256000
  %v1784 = vsel %vm1783, %v1776, 0.0
  %1785 = vadd.xlane.f32.xlu0 %v1784
  %v1786 = vpop.xlane.xlu0 %1785
  %v1787 = vperm.slane %v40, 0
  %v1788 = vadd.f32 %v1782, %v1787
  %v1789 = vadd.f32 %v1786, %v1787
  %v1792 = vrot.slane %v1789, 1
  %v1793 = vrot.slane %v1789, 2
  %v1794 = vrot.slane %v1789, 3
  %v1799 = vsub.f32 %v21, %v1788
  %v1800 = vsub.f32 %v22, %v1792
  %v1801 = vsub.f32 %v23, %v1793
  %v1802 = vsub.f32 %v24, %v1794
  %1804 = vset.pattern.permute.xlu0 0
  %1805 = vperm.xlu0 %1804, %v1799
  %v1806 = vpop.permute.xlu0 %1805
  %1809 = vset.pattern.permute.xlu0 0
  %1810 = vperm.xlu0 %1809, %v1800
  %v1811 = vpop.permute.xlu0 %1810
  %1814 = vset.pattern.permute.xlu0 0
  %1815 = vperm.xlu0 %1814, %v1801
  %v1816 = vpop.permute.xlu0 %1815
  %1819 = vset.pattern.permute.xlu0 0
  %1820 = vperm.xlu0 %1819, %v1802
  %v1821 = vpop.permute.xlu0 %1820
  %v1823 = vperm.slane %v37, 0
  %v1824 = vmul.f32 %v1806, %v1823
  %v1825 = vmul.f32 %v1811, %v1823
  %v1826 = vmul.f32 %v1816, %v1823
  %v1827 = vmul.f32 %v1821, %v1823
  %v1828 = vpack.c.bf16 %v1698, %v1698
  %v1829 = vpack.c.bf16 %v1699, %v1699
  %v1830 = vpack.c.bf16 %v1700, %v1700
  %v1831 = vpack.c.bf16 %v1701, %v1701
  %v1836 = vunpack.c.l.b16 %v1828
  %v1837 = vunpack.c.l.b16 %v1829
  %v1838 = vunpack.c.l.b16 %v1830
  %v1839 = vunpack.c.l.b16 %v1831
  %v1840 = vrot.slane %v1836, 7
  %v1841 = vrot.slane %v1837, 6
  %v1842 = vsel %vm229, %v1841, %v1840
  %v1843 = vrot.slane %v1838, 5
  %v1844 = vsel %vm232, %v1843, %v1842
  %v1845 = vrot.slane %v1839, 4
  %v1846 = vsel %vm235, %v1845, %v1844
  %v1847 = vpack.c.b16 %v1846, %v1846
  %1848 = vrot.lane.b32.xlu0 %v1847, 96
  %v1849 = vpop.permute.xlu0 %1848
  %v1854 = vunpack.c.l.b16 %v30
  %v1855 = vunpack.c.l.b16 %v31
  %v1856 = vunpack.c.l.b16 %v32
  %v1857 = vunpack.c.l.b16 %v33
  %v1858 = vpack.c.b16 %v1855, %v1854
  %v1859 = vpack.c.b16 %v1857, %v1856
  %v1866 = vrot.slane %v1747, 7
  %v1867 = vsel %vm229, %v1866, %v1744
  %v1868 = vrot.slane %v1750, 6
  %v1869 = vsel %vm232, %v1868, %v1867
  %v1870 = vrot.slane %v1753, 5
  %v1871 = vsel %vm235, %v1870, %v1869
  %v1874 = vsel %vm252, %v1849, 0
  %1876 = vmatpush.bf16.msra.mxu0 0
  %1877 = vmatpush.bf16.msra.mxu0 0
  %1878 = vmatpush.bf16.msra.mxu0 0
  %1879 = vmatpush.bf16.msra.mxu0 0
  %1880 = vmatpush.bf16.msra.mxu0 0
  %1881 = vmatpush.bf16.msra.mxu0 0
  %1882 = vmatpush.bf16.msra.mxu0 %v1859
  %1883 = vmatpush.bf16.msra.mxu0 %v1858
  %1884 = vmatmul.bf16.gmra.mxu0 %v1874
  %v1885 = vpop.f32.mrf.mxu0
  %v1886 = vadd.f32 %v1871, %v1885
  %v1887 = vpop.f32.mrf.mxu0
  %1888 = vdwg.mxu0
  %v1893 = vrot.slane %v1824, 7
  %v1894 = vrot.slane %v1825, 6
  %v1895 = vsel %vm229, %v1894, %v1893
  %v1896 = vrot.slane %v1826, 5
  %v1897 = vsel %vm232, %v1896, %v1895
  %v1898 = vrot.slane %v1827, 4
  %v1899 = vsel %vm235, %v1898, %v1897
  %v1901 = vadd.f32 %v1886, %v1899
  %v1902 = vxor.u32 %v1901, 2147483648
  %v1903 = vmul.f32 %v1902, 1.442695
  %v1904 = vpow.pop %v1903
  %v1905 = vadd.f32 %v1904, 1.0
  %v1906 = vrcp.pop %v1905
  %v1907 = vmul.f32 %v1905, %v1906
  %v1908 = vsub.f32 1.0, %v1907
  %v1909 = vmul.f32 %v1906, %v1908
  %v1910 = vadd.f32 %v1906, %v1909
  %vm1911 = vweird.f32 %v1905
  %vm1912 = vweird.f32 %v1906
  %vm1913 = vmor %vm1911, %vm1912
  %v1914 = vsel %vm1913, %v1906, %v1910
  %v1915 = vand.u32 2147483647, %v1905
  %vm1916 = vcmp.eq.f32.partialorder %v1915, 8.507059e+37
  %v1917 = vand.u32 %v1905, 2147483648
  %v1918 = vor.u32 1.1754944e-38, %v1917
  %v1919 = vsel %vm1916, %v1918, %v1914
  %v1920 = vmul.f32 1.0, %v1919
  %1922 = vrot.lane.b32.xlu0 %v1901, 32
  %v1923 = vpop.permute.xlu0 %1922
  %v1925 = vmul.f32 %v1920, %v1923
  %1927 = vrot.lane.b32.xlu0 %v1925, 64
  %v1928 = vpop.permute.xlu0 %1927
  %v1930 = vadd.f32 %v1901, %v1928
  %v1931 = vtanh.pop %v1930
  %v1932 = vsub.f32 1.0, %v1920
  %1934 = vrot.lane.b32.xlu0 %v1931, 96
  %v1935 = vpop.permute.xlu0 %1934
  %v1937 = vmul.f32 %v1932, %v1935
  %v1942 = vrot.slane %v1698, 7
  %v1943 = vrot.slane %v1699, 6
  %v1944 = vsel %vm229, %v1943, %v1942
  %v1945 = vrot.slane %v1700, 5
  %v1946 = vsel %vm232, %v1945, %v1944
  %v1947 = vrot.slane %v1701, 4
  %v1948 = vsel %vm235, %v1947, %v1946
  %v1950 = vmul.f32 %v1920, %v1948
  %v1951 = vadd.f32 %v1937, %v1950
  %v1952 = vpack.c.bf16 %v1951, %v1951
  %1954 = vrot.lane.b32.xlu0 %v1952, 96
  %v1955 = vpop.permute.xlu0 %1954
  %v1956 = vrot.slane %v1744, 1
  %v1957 = vsel %vm229, %v1747, %v1956
  %v1958 = vrot.slane %v1750, 7
  %v1959 = vsel %vm232, %v1958, %v1957
  %v1960 = vrot.slane %v1753, 6
  %v1961 = vsel %vm235, %v1960, %v1959
  %v1964 = vsel %vm252, %v1955, 0
  %1966 = vmatpush.bf16.msra.mxu0 0
  %1967 = vmatpush.bf16.msra.mxu0 0
  %1968 = vmatpush.bf16.msra.mxu0 0
  %1969 = vmatpush.bf16.msra.mxu0 0
  %1970 = vmatpush.bf16.msra.mxu0 0
  %1971 = vmatpush.bf16.msra.mxu0 0
  %1972 = vmatpush.bf16.msra.mxu0 %v1859
  %1973 = vmatpush.bf16.msra.mxu0 %v1858
  %1974 = vmatmul.bf16.gmra.mxu0 %v1964
  %v1975 = vpop.f32.mrf.mxu0
  %v1976 = vadd.f32 %v1961, %v1975
  %v1977 = vpop.f32.mrf.mxu0
  %1978 = vdwg.mxu0
  %v1979 = vxor.u32 %v1976, 2147483648
  %v1980 = vmul.f32 %v1979, 1.442695
  %v1981 = vpow.pop %v1980
  %v1982 = vadd.f32 %v1981, 1.0
  %v1983 = vrcp.pop %v1982
  %v1984 = vmul.f32 %v1982, %v1983
  %v1985 = vsub.f32 1.0, %v1984
  %v1986 = vmul.f32 %v1983, %v1985
  %v1987 = vadd.f32 %v1983, %v1986
  %vm1988 = vweird.f32 %v1982
  %vm1989 = vweird.f32 %v1983
  %vm1990 = vmor %vm1988, %vm1989
  %v1991 = vsel %vm1990, %v1983, %v1987
  %v1992 = vand.u32 2147483647, %v1982
  %vm1993 = vcmp.eq.f32.partialorder %v1992, 8.507059e+37
  %v1994 = vand.u32 %v1982, 2147483648
  %v1995 = vor.u32 1.1754944e-38, %v1994
  %v1996 = vsel %vm1993, %v1995, %v1991
  %v1997 = vmul.f32 1.0, %v1996
  %1999 = vrot.lane.b32.xlu0 %v1976, 32
  %v2000 = vpop.permute.xlu0 %1999
  %v2002 = vmul.f32 %v1997, %v2000
  %2004 = vrot.lane.b32.xlu0 %v2002, 64
  %v2005 = vpop.permute.xlu0 %2004
  %v2007 = vadd.f32 %v1976, %v2005
  %v2008 = vtanh.pop %v2007
  %v2009 = vsub.f32 1.0, %v1997
  %2011 = vrot.lane.b32.xlu0 %v2008, 96
  %v2012 = vpop.permute.xlu0 %2011
  %v2014 = vmul.f32 %v2009, %v2012
  %v2015 = vmul.f32 %v1997, %v1951
  %v2016 = vadd.f32 %v2014, %v2015
  %v2017 = vpack.c.bf16 %v2016, %v2016
  %2019 = vrot.lane.b32.xlu0 %v2017, 96
  %v2020 = vpop.permute.xlu0 %2019
  %v2021 = vrot.slane %v1744, 2
  %v2022 = vrot.slane %v1747, 1
  %v2023 = vsel %vm229, %v2022, %v2021
  %v2024 = vsel %vm232, %v1750, %v2023
  %v2025 = vrot.slane %v1753, 7
  %v2026 = vsel %vm235, %v2025, %v2024
  %v2029 = vsel %vm252, %v2020, 0
  %2031 = vmatpush.bf16.msra.mxu0 0
  %2032 = vmatpush.bf16.msra.mxu0 0
  %2033 = vmatpush.bf16.msra.mxu0 0
  %2034 = vmatpush.bf16.msra.mxu0 0
  %2035 = vmatpush.bf16.msra.mxu0 0
  %2036 = vmatpush.bf16.msra.mxu0 0
  %2037 = vmatpush.bf16.msra.mxu0 %v1859
  %2038 = vmatpush.bf16.msra.mxu0 %v1858
  %2039 = vmatmul.bf16.gmra.mxu0 %v2029
  %v2040 = vpop.f32.mrf.mxu0
  %v2041 = vadd.f32 %v2026, %v2040
  %v2042 = vpop.f32.mrf.mxu0
  %2043 = vdwg.mxu0
  %v2044 = vxor.u32 %v2041, 2147483648
  %v2045 = vmul.f32 %v2044, 1.442695
  %v2046 = vpow.pop %v2045
  %v2047 = vadd.f32 %v2046, 1.0
  %v2048 = vrcp.pop %v2047
  %v2049 = vmul.f32 %v2047, %v2048
  %v2050 = vsub.f32 1.0, %v2049
  %v2051 = vmul.f32 %v2048, %v2050
  %v2052 = vadd.f32 %v2048, %v2051
  %vm2053 = vweird.f32 %v2047
  %vm2054 = vweird.f32 %v2048
  %vm2055 = vmor %vm2053, %vm2054
  %v2056 = vsel %vm2055, %v2048, %v2052
  %v2057 = vand.u32 2147483647, %v2047
  %vm2058 = vcmp.eq.f32.partialorder %v2057, 8.507059e+37
  %v2059 = vand.u32 %v2047, 2147483648
  %v2060 = vor.u32 1.1754944e-38, %v2059
  %v2061 = vsel %vm2058, %v2060, %v2056
  %v2062 = vmul.f32 1.0, %v2061
  %2064 = vrot.lane.b32.xlu0 %v2041, 32
  %v2065 = vpop.permute.xlu0 %2064
  %v2067 = vmul.f32 %v2062, %v2065
  %2069 = vrot.lane.b32.xlu0 %v2067, 64
  %v2070 = vpop.permute.xlu0 %2069
  %v2072 = vadd.f32 %v2041, %v2070
  %v2073 = vtanh.pop %v2072
  %v2074 = vsub.f32 1.0, %v2062
  %2076 = vrot.lane.b32.xlu0 %v2073, 96
  %v2077 = vpop.permute.xlu0 %2076
  %v2079 = vmul.f32 %v2074, %v2077
  %v2080 = vmul.f32 %v2062, %v2016
  %v2081 = vadd.f32 %v2079, %v2080
  %v2082 = vpack.c.bf16 %v2081, %v2081
  %2084 = vrot.lane.b32.xlu0 %v2082, 96
  %v2085 = vpop.permute.xlu0 %2084
  %v2086 = vrot.slane %v1744, 3
  %v2087 = vrot.slane %v1747, 2
  %v2088 = vsel %vm229, %v2087, %v2086
  %v2089 = vrot.slane %v1750, 1
  %v2090 = vsel %vm232, %v2089, %v2088
  %v2091 = vsel %vm235, %v1753, %v2090
  %v2094 = vsel %vm252, %v2085, 0
  %2096 = vmatpush.bf16.msra.mxu0 0
  %2097 = vmatpush.bf16.msra.mxu0 0
  %2098 = vmatpush.bf16.msra.mxu0 0
  %2099 = vmatpush.bf16.msra.mxu0 0
  %2100 = vmatpush.bf16.msra.mxu0 0
  %2101 = vmatpush.bf16.msra.mxu0 0
  %2102 = vmatpush.bf16.msra.mxu0 %v1859
  %2103 = vmatpush.bf16.msra.mxu0 %v1858
  %2104 = vmatmul.bf16.gmra.mxu0 %v2094
  %v2105 = vpop.f32.mrf.mxu0
  %v2106 = vadd.f32 %v2091, %v2105
  %v2107 = vpop.f32.mrf.mxu0
  %2108 = vdwg.mxu0
  %v2109 = vxor.u32 %v2106, 2147483648
  %v2110 = vmul.f32 %v2109, 1.442695
  %v2111 = vpow.pop %v2110
  %v2112 = vadd.f32 %v2111, 1.0
  %v2113 = vrcp.pop %v2112
  %v2114 = vmul.f32 %v2112, %v2113
  %v2115 = vsub.f32 1.0, %v2114
  %v2116 = vmul.f32 %v2113, %v2115
  %v2117 = vadd.f32 %v2113, %v2116
  %vm2118 = vweird.f32 %v2112
  %vm2119 = vweird.f32 %v2113
  %vm2120 = vmor %vm2118, %vm2119
  %v2121 = vsel %vm2120, %v2113, %v2117
  %v2122 = vand.u32 2147483647, %v2112
  %vm2123 = vcmp.eq.f32.partialorder %v2122, 8.507059e+37
  %v2124 = vand.u32 %v2112, 2147483648
  %v2125 = vor.u32 1.1754944e-38, %v2124
  %v2126 = vsel %vm2123, %v2125, %v2121
  %v2127 = vmul.f32 1.0, %v2126
  %2129 = vrot.lane.b32.xlu0 %v2106, 32
  %v2130 = vpop.permute.xlu0 %2129
  %v2132 = vmul.f32 %v2127, %v2130
  %2134 = vrot.lane.b32.xlu0 %v2132, 64
  %v2135 = vpop.permute.xlu0 %2134
  %v2137 = vadd.f32 %v2106, %v2135
  %v2138 = vtanh.pop %v2137
  %v2139 = vsub.f32 1.0, %v2127
  %2141 = vrot.lane.b32.xlu0 %v2138, 96
  %v2142 = vpop.permute.xlu0 %2141
  %v2144 = vmul.f32 %v2139, %v2142
  %v2145 = vmul.f32 %v2127, %v2081
  %v2146 = vadd.f32 %v2144, %v2145
  %v2147 = vpack.c.bf16 %v2146, %v2146
  %2149 = vrot.lane.b32.xlu0 %v2147, 96
  %v2150 = vpop.permute.xlu0 %2149
  %v2151 = vrot.slane %v1744, 4
  %v2152 = vrot.slane %v1747, 3
  %v2153 = vsel %vm229, %v2152, %v2151
  %v2154 = vrot.slane %v1750, 2
  %v2155 = vsel %vm232, %v2154, %v2153
  %v2156 = vrot.slane %v1753, 1
  %v2157 = vsel %vm235, %v2156, %v2155
  %v2160 = vsel %vm252, %v2150, 0
  %2162 = vmatpush.bf16.msra.mxu0 0
  %2163 = vmatpush.bf16.msra.mxu0 0
  %2164 = vmatpush.bf16.msra.mxu0 0
  %2165 = vmatpush.bf16.msra.mxu0 0
  %2166 = vmatpush.bf16.msra.mxu0 0
  %2167 = vmatpush.bf16.msra.mxu0 0
  %2168 = vmatpush.bf16.msra.mxu0 %v1859
  %2169 = vmatpush.bf16.msra.mxu0 %v1858
  %2170 = vmatmul.bf16.gmra.mxu0 %v2160
  %v2171 = vpop.f32.mrf.mxu0
  %v2172 = vadd.f32 %v2157, %v2171
  %v2173 = vpop.f32.mrf.mxu0
  %2174 = vdwg.mxu0
  %v2175 = vxor.u32 %v2172, 2147483648
  %v2176 = vmul.f32 %v2175, 1.442695
  %v2177 = vpow.pop %v2176
  %v2178 = vadd.f32 %v2177, 1.0
  %v2179 = vrcp.pop %v2178
  %v2180 = vmul.f32 %v2178, %v2179
  %v2181 = vsub.f32 1.0, %v2180
  %v2182 = vmul.f32 %v2179, %v2181
  %v2183 = vadd.f32 %v2179, %v2182
  %vm2184 = vweird.f32 %v2178
  %vm2185 = vweird.f32 %v2179
  %vm2186 = vmor %vm2184, %vm2185
  %v2187 = vsel %vm2186, %v2179, %v2183
  %v2188 = vand.u32 2147483647, %v2178
  %vm2189 = vcmp.eq.f32.partialorder %v2188, 8.507059e+37
  %v2190 = vand.u32 %v2178, 2147483648
  %v2191 = vor.u32 1.1754944e-38, %v2190
  %v2192 = vsel %vm2189, %v2191, %v2187
  %v2193 = vmul.f32 1.0, %v2192
  %2195 = vrot.lane.b32.xlu0 %v2172, 32
  %v2196 = vpop.permute.xlu0 %2195
  %v2198 = vmul.f32 %v2193, %v2196
  %2200 = vrot.lane.b32.xlu0 %v2198, 64
  %v2201 = vpop.permute.xlu0 %2200
  %v2203 = vadd.f32 %v2172, %v2201
  %v2204 = vtanh.pop %v2203
  %v2205 = vsub.f32 1.0, %v2193
  %2207 = vrot.lane.b32.xlu0 %v2204, 96
  %v2208 = vpop.permute.xlu0 %2207
  %v2210 = vmul.f32 %v2205, %v2208
  %v2211 = vmul.f32 %v2193, %v2146
  %v2212 = vadd.f32 %v2210, %v2211
  %v2213 = vpack.c.bf16 %v2212, %v2212
  %2215 = vrot.lane.b32.xlu0 %v2213, 96
  %v2216 = vpop.permute.xlu0 %2215
  %v2217 = vrot.slane %v1744, 5
  %v2218 = vrot.slane %v1747, 4
  %v2219 = vsel %vm229, %v2218, %v2217
  %v2220 = vrot.slane %v1750, 3
  %v2221 = vsel %vm232, %v2220, %v2219
  %v2222 = vrot.slane %v1753, 2
  %v2223 = vsel %vm235, %v2222, %v2221
  %v2226 = vsel %vm252, %v2216, 0
  %2228 = vmatpush.bf16.msra.mxu0 0
  %2229 = vmatpush.bf16.msra.mxu0 0
  %2230 = vmatpush.bf16.msra.mxu0 0
  %2231 = vmatpush.bf16.msra.mxu0 0
  %2232 = vmatpush.bf16.msra.mxu0 0
  %2233 = vmatpush.bf16.msra.mxu0 0
  %2234 = vmatpush.bf16.msra.mxu0 %v1859
  %2235 = vmatpush.bf16.msra.mxu0 %v1858
  %2236 = vmatmul.bf16.gmra.mxu0 %v2226
  %v2237 = vpop.f32.mrf.mxu0
  %v2238 = vadd.f32 %v2223, %v2237
  %v2239 = vpop.f32.mrf.mxu0
  %2240 = vdwg.mxu0
  %v2241 = vxor.u32 %v2238, 2147483648
  %v2242 = vmul.f32 %v2241, 1.442695
  %v2243 = vpow.pop %v2242
  %v2244 = vadd.f32 %v2243, 1.0
  %v2245 = vrcp.pop %v2244
  %v2246 = vmul.f32 %v2244, %v2245
  %v2247 = vsub.f32 1.0, %v2246
  %v2248 = vmul.f32 %v2245, %v2247
  %v2249 = vadd.f32 %v2245, %v2248
  %vm2250 = vweird.f32 %v2244
  %vm2251 = vweird.f32 %v2245
  %vm2252 = vmor %vm2250, %vm2251
  %v2253 = vsel %vm2252, %v2245, %v2249
  %v2254 = vand.u32 2147483647, %v2244
  %vm2255 = vcmp.eq.f32.partialorder %v2254, 8.507059e+37
  %v2256 = vand.u32 %v2244, 2147483648
  %v2257 = vor.u32 1.1754944e-38, %v2256
  %v2258 = vsel %vm2255, %v2257, %v2253
  %v2259 = vmul.f32 1.0, %v2258
  %2261 = vrot.lane.b32.xlu0 %v2238, 32
  %v2262 = vpop.permute.xlu0 %2261
  %v2264 = vmul.f32 %v2259, %v2262
  %2266 = vrot.lane.b32.xlu0 %v2264, 64
  %v2267 = vpop.permute.xlu0 %2266
  %v2269 = vadd.f32 %v2238, %v2267
  %v2270 = vtanh.pop %v2269
  %v2271 = vsub.f32 1.0, %v2259
  %2273 = vrot.lane.b32.xlu0 %v2270, 96
  %v2274 = vpop.permute.xlu0 %2273
  %v2276 = vmul.f32 %v2271, %v2274
  %v2277 = vmul.f32 %v2259, %v2212
  %v2278 = vadd.f32 %v2276, %v2277
  %v2279 = vpack.c.bf16 %v2278, %v2278
  %2281 = vrot.lane.b32.xlu0 %v2279, 96
  %v2282 = vpop.permute.xlu0 %2281
  %v2283 = vrot.slane %v1744, 6
  %v2284 = vrot.slane %v1747, 5
  %v2285 = vsel %vm229, %v2284, %v2283
  %v2286 = vrot.slane %v1750, 4
  %v2287 = vsel %vm232, %v2286, %v2285
  %v2288 = vrot.slane %v1753, 3
  %v2289 = vsel %vm235, %v2288, %v2287
  %v2292 = vsel %vm252, %v2282, 0
  %2294 = vmatpush.bf16.msra.mxu0 0
  %2295 = vmatpush.bf16.msra.mxu0 0
  %2296 = vmatpush.bf16.msra.mxu0 0
  %2297 = vmatpush.bf16.msra.mxu0 0
  %2298 = vmatpush.bf16.msra.mxu0 0
  %2299 = vmatpush.bf16.msra.mxu0 0
  %2300 = vmatpush.bf16.msra.mxu0 %v1859
  %2301 = vmatpush.bf16.msra.mxu0 %v1858
  %2302 = vmatmul.bf16.gmra.mxu0 %v2292
  %v2303 = vpop.f32.mrf.mxu0
  %v2304 = vadd.f32 %v2289, %v2303
  %v2305 = vpop.f32.mrf.mxu0
  %2306 = vdwg.mxu0
  %v2307 = vxor.u32 %v2304, 2147483648
  %v2308 = vmul.f32 %v2307, 1.442695
  %v2309 = vpow.pop %v2308
  %v2310 = vadd.f32 %v2309, 1.0
  %v2311 = vrcp.pop %v2310
  %v2312 = vmul.f32 %v2310, %v2311
  %v2313 = vsub.f32 1.0, %v2312
  %v2314 = vmul.f32 %v2311, %v2313
  %v2315 = vadd.f32 %v2311, %v2314
  %vm2316 = vweird.f32 %v2310
  %vm2317 = vweird.f32 %v2311
  %vm2318 = vmor %vm2316, %vm2317
  %v2319 = vsel %vm2318, %v2311, %v2315
  %v2320 = vand.u32 2147483647, %v2310
  %vm2321 = vcmp.eq.f32.partialorder %v2320, 8.507059e+37
  %v2322 = vand.u32 %v2310, 2147483648
  %v2323 = vor.u32 1.1754944e-38, %v2322
  %v2324 = vsel %vm2321, %v2323, %v2319
  %v2325 = vmul.f32 1.0, %v2324
  %2327 = vrot.lane.b32.xlu0 %v2304, 32
  %v2328 = vpop.permute.xlu0 %2327
  %v2330 = vmul.f32 %v2325, %v2328
  %2332 = vrot.lane.b32.xlu0 %v2330, 64
  %v2333 = vpop.permute.xlu0 %2332
  %v2335 = vadd.f32 %v2304, %v2333
  %v2336 = vtanh.pop %v2335
  %v2337 = vsub.f32 1.0, %v2325
  %2339 = vrot.lane.b32.xlu0 %v2336, 96
  %v2340 = vpop.permute.xlu0 %2339
  %v2342 = vmul.f32 %v2337, %v2340
  %v2343 = vmul.f32 %v2325, %v2278
  %v2344 = vadd.f32 %v2342, %v2343
  %v2345 = vpack.c.bf16 %v2344, %v2344
  %2347 = vrot.lane.b32.xlu0 %v2345, 96
  %v2348 = vpop.permute.xlu0 %2347
  %v2349 = vrot.slane %v1744, 7
  %v2350 = vrot.slane %v1747, 6
  %v2351 = vsel %vm229, %v2350, %v2349
  %v2352 = vrot.slane %v1750, 5
  %v2353 = vsel %vm232, %v2352, %v2351
  %v2354 = vrot.slane %v1753, 4
  %v2355 = vsel %vm235, %v2354, %v2353
  %v2358 = vsel %vm252, %v2348, 0
  %2360 = vmatpush.bf16.msra.mxu0 0
  %2361 = vmatpush.bf16.msra.mxu0 0
  %2362 = vmatpush.bf16.msra.mxu0 0
  %2363 = vmatpush.bf16.msra.mxu0 0
  %2364 = vmatpush.bf16.msra.mxu0 0
  %2365 = vmatpush.bf16.msra.mxu0 0
  %2366 = vmatpush.bf16.msra.mxu0 %v1859
  %2367 = vmatpush.bf16.msra.mxu0 %v1858
  %2368 = vmatmul.bf16.gmra.mxu0 %v2358
  %v2369 = vpop.f32.mrf.mxu0
  %v2370 = vadd.f32 %v2355, %v2369
  %v2371 = vpop.f32.mrf.mxu0
  %2372 = vdwg.mxu0
  %v2373 = vxor.u32 %v2370, 2147483648
  %v2374 = vmul.f32 %v2373, 1.442695
  %v2375 = vpow.pop %v2374
  %v2376 = vadd.f32 %v2375, 1.0
  %v2377 = vrcp.pop %v2376
  %v2378 = vmul.f32 %v2376, %v2377
  %v2379 = vsub.f32 1.0, %v2378
  %v2380 = vmul.f32 %v2377, %v2379
  %v2381 = vadd.f32 %v2377, %v2380
  %vm2382 = vweird.f32 %v2376
  %vm2383 = vweird.f32 %v2377
  %vm2384 = vmor %vm2382, %vm2383
  %v2385 = vsel %vm2384, %v2377, %v2381
  %v2386 = vand.u32 2147483647, %v2376
  %vm2387 = vcmp.eq.f32.partialorder %v2386, 8.507059e+37
  %v2388 = vand.u32 %v2376, 2147483648
  %v2389 = vor.u32 1.1754944e-38, %v2388
  %v2390 = vsel %vm2387, %v2389, %v2385
  %v2391 = vmul.f32 1.0, %v2390
  %2393 = vrot.lane.b32.xlu0 %v2370, 32
  %v2394 = vpop.permute.xlu0 %2393
  %v2396 = vmul.f32 %v2391, %v2394
  %2398 = vrot.lane.b32.xlu0 %v2396, 64
  %v2399 = vpop.permute.xlu0 %2398
  %v2401 = vadd.f32 %v2370, %v2399
  %v2402 = vtanh.pop %v2401
  %v2403 = vsub.f32 1.0, %v2391
  %2405 = vrot.lane.b32.xlu0 %v2402, 96
  %v2406 = vpop.permute.xlu0 %2405
  %v2408 = vmul.f32 %v2403, %v2406
  %v2409 = vmul.f32 %v2391, %v2344
  %v2410 = vadd.f32 %v2408, %v2409
  %v2412 = vrot.slane %v1951, 1
  %v2413 = vrot.slane %v1951, 2
  %v2414 = vrot.slane %v1951, 3
  %v2419 = vrot.slane %v2016, 1
  %v2420 = vrot.slane %v2016, 2
  %v2421 = vrot.slane %v2016, 3
  %v2423 = vrot.slane %v2081, 1
  %v2424 = vrot.slane %v2081, 2
  %v2425 = vrot.slane %v2081, 3
  %v2427 = vrot.slane %v2146, 1
  %v2428 = vrot.slane %v2146, 2
  %v2429 = vrot.slane %v2146, 3
  %v2431 = vrot.slane %v2212, 1
  %v2432 = vrot.slane %v2212, 2
  %v2433 = vrot.slane %v2212, 3
  %v2435 = vrot.slane %v2278, 1
  %v2436 = vrot.slane %v2278, 2
  %v2437 = vrot.slane %v2278, 3
  %v2439 = vrot.slane %v2344, 1
  %v2440 = vrot.slane %v2344, 2
  %v2441 = vrot.slane %v2344, 3
  %v2443 = vrot.slane %v2410, 1
  %v2444 = vrot.slane %v2410, 2
  %v2445 = vrot.slane %v2410, 3
  %v2446 = vperm.slane %v2016, 0
  %v2447 = vperm.slane %v2419, 0
  %v2448 = vperm.slane %v2420, 0
  %v2449 = vperm.slane %v2421, 0
  %v2454 = vperm.slane %v2081, 0
  %v2455 = vperm.slane %v2423, 0
  %v2456 = vperm.slane %v2424, 0
  %v2457 = vperm.slane %v2425, 0
  %v2462 = vperm.slane %v2146, 0
  %v2463 = vperm.slane %v2427, 0
  %v2464 = vperm.slane %v2428, 0
  %v2465 = vperm.slane %v2429, 0
  %v2470 = vperm.slane %v2212, 0
  %v2471 = vperm.slane %v2431, 0
  %v2472 = vperm.slane %v2432, 0
  %v2473 = vperm.slane %v2433, 0
  %v2478 = vperm.slane %v2278, 0
  %v2479 = vperm.slane %v2435, 0
  %v2480 = vperm.slane %v2436, 0
  %v2481 = vperm.slane %v2437, 0
  %v2486 = vperm.slane %v2344, 0
  %v2487 = vperm.slane %v2439, 0
  %v2488 = vperm.slane %v2440, 0
  %v2489 = vperm.slane %v2441, 0
  %v2494 = vperm.slane %v2410, 0
  %v2495 = vperm.slane %v2443, 0
  %v2496 = vperm.slane %v2444, 0
  %v2497 = vperm.slane %v2445, 0
  %vm2502 = vcmask 1040384
  %v2503 = vsel %vm2502, %v1951, %v2446
  %v2504 = vsel %vm2502, %v2412, %v2447
  %v2505 = vsel %vm2502, %v2413, %v2448
  %v2506 = vsel %vm2502, %v2414, %v2449
  %vm2507 = vcmask 1041408
  %v2508 = vsel %vm2507, %v2503, %v2454
  %v2509 = vsel %vm2507, %v2504, %v2455
  %v2510 = vsel %vm2507, %v2505, %v2456
  %v2511 = vsel %vm2507, %v2506, %v2457
  %vm2512 = vcmask 1042432
  %v2513 = vsel %vm2512, %v2508, %v2462
  %v2514 = vsel %vm2512, %v2509, %v2463
  %v2515 = vsel %vm2512, %v2510, %v2464
  %v2516 = vsel %vm2512, %v2511, %v2465
  %v2517 = vsel %vm1722, %v2513, %v2470
  %v2518 = vsel %vm1722, %v2514, %v2471
  %v2519 = vsel %vm1722, %v2515, %v2472
  %v2520 = vsel %vm1722, %v2516, %v2473
  %vm2521 = vcmask 1044480
  %v2522 = vsel %vm2521, %v2517, %v2478
  %v2523 = vsel %vm2521, %v2518, %v2479
  %v2524 = vsel %vm2521, %v2519, %v2480
  %v2525 = vsel %vm2521, %v2520, %v2481
  %vm2526 = vcmask 1045504
  %v2527 = vsel %vm2526, %v2522, %v2486
  %v2528 = vsel %vm2526, %v2523, %v2487
  %v2529 = vsel %vm2526, %v2524, %v2488
  %v2530 = vsel %vm2526, %v2525, %v2489
  %vm2531 = vcmask 1046528
  %v2532 = vsel %vm2531, %v2527, %v2494
  %v2533 = vsel %vm2531, %v2528, %v2495
  %v2534 = vsel %vm2531, %v2529, %v2496
  %v2535 = vsel %vm2531, %v2530, %v2497
  %v2536 = vmul.f32 %v2532, %v1758
  %v2537 = vmul.f32 %v2533, %v1758
  %v2538 = vmul.f32 %v2534, %v1758
  %v2539 = vmul.f32 %v2535, %v1758
  %2544 = vrot.lane.b32.xlu0 %v2536, 96
  %v2545 = vpop.permute.xlu0 %2544
  %2546 = vrot.lane.b32.xlu0 %v2537, 96
  %v2547 = vpop.permute.xlu0 %2546
  %2548 = vrot.lane.b32.xlu0 %v2538, 96
  %v2549 = vpop.permute.xlu0 %2548
  %2550 = vrot.lane.b32.xlu0 %v2539, 96
  %v2551 = vpop.permute.xlu0 %2550
  %v2556 = vsel %vm252, %v2545, 0.0
  %2557 = vadd.xlane.f32.xlu0 %v2556
  %v2558 = vpop.xlane.xlu0 %2557
  %v2559 = vsel %vm252, %v2547, 0.0
  %2560 = vadd.xlane.f32.xlu0 %v2559
  %v2561 = vpop.xlane.xlu0 %2560
  %v2562 = vsel %vm252, %v2549, 0.0
  %2563 = vadd.xlane.f32.xlu0 %v2562
  %v2564 = vpop.xlane.xlu0 %2563
  %v2565 = vsel %vm252, %v2551, 0.0
  %2566 = vadd.xlane.f32.xlu0 %v2565
  %v2567 = vpop.xlane.xlu0 %2566
  %v2568 = vadd.f32 %v2558, %v1787
  %v2569 = vadd.f32 %v2561, %v1787
  %v2570 = vadd.f32 %v2564, %v1787
  %v2571 = vadd.f32 %v2567, %v1787
  %vm2572 = vcmask 7168
  %2573 = vst.msk [vmem:[%s5] sm:$0xff] %vm2572, %v2568
  %2574 = vst.msk [vmem:[%s5 + $0x8] sm:$0xff] %vm2572, %v2569
  %2575 = vst.msk [vmem:[%s5 + $0x10] sm:$0xff] %vm2572, %v2570
  %2576 = vst.msk [vmem:[%s5 + $0x18] sm:$0xff] %vm2572, %v2571
  // Predicated region
  $region22: #{cgf_en_de_forward.1} parent=0 // pred_check
    _
  $region23: #{cgf_en_de_forward.1} parent=0 // pred_check_branch
    %2578 = sbr.rel (0) target = $region25
  $region24: #{cgf_en_de_forward.1} parent=0 // pred_region
    _
  $region25: #{cgf_en_de_forward.1} parent=0 // pred_fallthru
    _
  // Predicated region
  $region26: #{cgf_en_de_forward.1} parent=0 // pred_check
    _
  $region27: #{cgf_en_de_forward.1} parent=0 // pred_check_branch
    %2580 = sbr.rel (0) target = $region29
  $region28: #{cgf_en_de_forward.1} parent=0 // pred_region
    _
  $region29: #{cgf_en_de_forward.1} parent=0 // pred_fallthru
    _

</llo_original>
